<compile_context>
chip_gen: v7x
topology: tpu7x:2x2x1
jax: 0.10.0
libtpu: 0.0.40
codegen_flags: <defaults>
</compile_context>

<pallas_src>
import functools
import math

import jax
import jax.numpy as jnp
from jax import lax
from jax.experimental import pallas as pl
from jax.experimental.pallas import tpu as pltpu


def _layer_norm(y, gamma, beta, eps=1e-6):
    mu = jnp.mean(y, axis=-1, keepdims=True)
    var = jnp.mean((y - mu) ** 2, axis=-1, keepdims=True)
    return (y - mu) * lax.rsqrt(var + eps) * gamma + beta


def _mha_gru_kernel(
    x_ref,        # (1, S, D)  input block for this batch element
    mask_ref,     # (S, S)     additive attention mask (float32)
    wqkv_ref,     # (3, D, D)  q/k/v projection weights, pre-transposed
    wo_ref,       # (D, D)     output projection weight, pre-transposed
    ln1_ref,      # (2, 1, D)  [gamma, beta] of norm_1
    wih_ref,      # (3, D, F)  GRU input weights  [r, z, n], pre-transposed
    whh_ref,      # (3, F, F)  GRU hidden weights [r, z, n], pre-transposed
    bg_ref,       # (4, 1, F)  GRU biases [b_r, b_z, b_in, b_hn]
    wfc_ref,      # (F, D)     1x1-conv (fc) weight, pre-transposed
    bfc_ref,      # (1, D)     fc bias
    ln2_ref,      # (2, 1, D)  [gamma, beta] of norm_2
    o_ref,        # (1, S, D)  output block
    gr_ref,       # (S, F) scratch: input contribution, r gate
    gz_ref,       # (S, F) scratch: input contribution, z gate
    gn_ref,       # (S, F) scratch: input contribution, n gate
    h_ref,        # (1, F) scratch: GRU hidden state
    gout_ref,     # (S, F) scratch: GRU outputs for all time steps
    *,
    n_heads,
):
    S = x_ref.shape[1]
    D = x_ref.shape[2]
    hd = D // n_heads
    scale = 1.0 / math.sqrt(hd)

    x = x_ref[0]                       # [S, D]
    mask = mask_ref[...]               # [S, S]

    # ---- Multi-head self attention (mask applied inline on the score tile) ----
    q = jnp.dot(x, wqkv_ref[0], preferred_element_type=jnp.float32)
    k = jnp.dot(x, wqkv_ref[1], preferred_element_type=jnp.float32)
    v = jnp.dot(x, wqkv_ref[2], preferred_element_type=jnp.float32)

    heads = []
    for hidx in range(n_heads):
        sl = slice(hidx * hd, (hidx + 1) * hd)
        qh = q[:, sl] * scale
        kh = k[:, sl]
        vh = v[:, sl]
        s = jnp.einsum("qc,kc->qk", qh, kh,
                       preferred_element_type=jnp.float32) + mask
        s = s - jnp.max(s, axis=-1, keepdims=True)
        p = jnp.exp(s)
        p = p / jnp.sum(p, axis=-1, keepdims=True)
        heads.append(jnp.dot(p, vh, preferred_element_type=jnp.float32))
    attn = jnp.concatenate(heads, axis=-1)                         # [S, D]
    attn = jnp.dot(attn, wo_ref[...], preferred_element_type=jnp.float32)

    # ---- residual + LayerNorm 1 ----
    layer_1 = _layer_norm(x + attn, ln1_ref[0], ln1_ref[1])        # [S, D]

    # ---- GRU: batch the input-side matmuls over all time steps, then the
    #      sequential recurrence runs over the time axis ----
    gr_ref[...] = jnp.dot(layer_1, wih_ref[0],
                          preferred_element_type=jnp.float32) + bg_ref[0]
    gz_ref[...] = jnp.dot(layer_1, wih_ref[1],
                          preferred_element_type=jnp.float32) + bg_ref[1]
    gn_ref[...] = jnp.dot(layer_1, wih_ref[2],
                          preferred_element_type=jnp.float32) + bg_ref[2]
    h_ref[...] = jnp.zeros_like(h_ref)

    whr = whh_ref[0]
    whz = whh_ref[1]
    whn = whh_ref[2]
    bhn = bg_ref[3]

    @pl.loop(0, S)
    def _(t):
        h_prev = h_ref[...]                                        # [1, F]
        r = jax.nn.sigmoid(
            gr_ref[pl.ds(t, 1), :]
            + jnp.dot(h_prev, whr, preferred_element_type=jnp.float32))
        z = jax.nn.sigmoid(
            gz_ref[pl.ds(t, 1), :]
            + jnp.dot(h_prev, whz, preferred_element_type=jnp.float32))
        n = jnp.tanh(
            gn_ref[pl.ds(t, 1), :]
            + r * (jnp.dot(h_prev, whn, preferred_element_type=jnp.float32) + bhn))
        h_new = (1.0 - z) * n + z * h_prev
        h_ref[...] = h_new
        gout_ref[pl.ds(t, 1), :] = h_new

    # ---- ReLU + 1x1 conv (fc) + residual + LayerNorm 2 ----
    a = jnp.maximum(gout_ref[...], 0.0)                            # [S, F]
    y2 = jnp.dot(a, wfc_ref[...],
                 preferred_element_type=jnp.float32) + bfc_ref[...]
    y2 = layer_1 + y2
    o_ref[0] = _layer_norm(y2, ln2_ref[0], ln2_ref[1]).astype(o_ref.dtype)


def mha_gru_block(x, att_mask, params, *, n_heads):
    """Pallas equivalent of MHAblock_GRU(d_model, d_ff, n_heads).forward(x, att_mask)."""
    B, S, D = x.shape
    F = params["wih_t"].shape[-1]
    kernel = functools.partial(_mha_gru_kernel, n_heads=n_heads)

    grid_spec = pltpu.PrefetchScalarGridSpec(
        num_scalar_prefetch=0,
        grid=(B,),
        in_specs=[
            pl.BlockSpec((1, S, D), lambda b: (b, 0, 0)),   # x (per-batch tile)
            pl.BlockSpec((S, S), lambda b: (0, 0)),         # att_mask (resident)
            pl.BlockSpec((3, D, D), lambda b: (0, 0, 0)),   # wqkv_t
            pl.BlockSpec((D, D), lambda b: (0, 0)),         # wo_t
            pl.BlockSpec((2, 1, D), lambda b: (0, 0, 0)),   # ln1 gamma/beta
            pl.BlockSpec((3, D, F), lambda b: (0, 0, 0)),   # wih_t
            pl.BlockSpec((3, F, F), lambda b: (0, 0, 0)),   # whh_t
            pl.BlockSpec((4, 1, F), lambda b: (0, 0, 0)),   # GRU biases
            pl.BlockSpec((F, D), lambda b: (0, 0)),         # wfc_t
            pl.BlockSpec((1, D), lambda b: (0, 0)),         # bfc
            pl.BlockSpec((2, 1, D), lambda b: (0, 0, 0)),   # ln2 gamma/beta
        ],
        out_specs=pl.BlockSpec((1, S, D), lambda b: (b, 0, 0)),
        scratch_shapes=[
            pltpu.VMEM((S, F), jnp.float32),   # gr (input contribution)
            pltpu.VMEM((S, F), jnp.float32),   # gz
            pltpu.VMEM((S, F), jnp.float32),   # gn
            pltpu.VMEM((1, F), jnp.float32),   # GRU hidden state
            pltpu.VMEM((S, F), jnp.float32),   # GRU outputs
        ],
    )

    return pl.pallas_call(
        kernel,
        out_shape=jax.ShapeDtypeStruct((B, S, D), x.dtype),
        grid_spec=grid_spec,
        compiler_params=pltpu.CompilerParams(
            dimension_semantics=("parallel",)),
    )(x, att_mask, params["wqkv_t"], params["wo_t"], params["ln1"],
      params["wih_t"], params["whh_t"], params["bg"], params["wfc_t"],
      params["bfc"], params["ln2"])


if __name__ == "__main__":
    B, S, D, F, H = 2, 16, 32, 64, 4     # batch, seq, d_model, d_ff, n_heads

    key = jax.random.PRNGKey(0)
    ks = iter(jax.random.split(key, 32))

    def nrm(shape, scale):
        return (scale * jax.random.normal(next(ks), shape)).astype(jnp.float32)

    x = nrm((B, S, D), 1.0)

    # Additive causal mask built with plain jnp; it is consumed directly by the
    # fused attention kernel (no separate mask-materialization pallas_call).
    ii = jnp.arange(S)[:, None]
    jj = jnp.arange(S)[None, :]
    att_mask = jnp.where(ii < jj, -1e9, 0.0).astype(jnp.float32)

    # MHA weights (bias=False as in the module), pre-transposed so the kernel
    # computes x @ W directly.
    wq_t = nrm((D, D), 0.15)
    wk_t = nrm((D, D), 0.15)
    wv_t = nrm((D, D), 0.15)
    wo_t = nrm((D, D), 0.15)
    ln1_g = 1.0 + nrm((D,), 0.05)
    ln1_b = nrm((D,), 0.05)

    # GRU weights/biases (PyTorch gate order r, z, n). b_r / b_z fold the two
    # PyTorch bias vectors (b_i* + b_h*); b_in / b_hn stay separate because the
    # reset gate multiplies only the hidden contribution of the n gate.
    wir_t = nrm((D, F), 0.15)
    wiz_t = nrm((D, F), 0.15)
    win_t = nrm((D, F), 0.15)
    whr_t = nrm((F, F), 0.15)
    whz_t = nrm((F, F), 0.15)
    whn_t = nrm((F, F), 0.15)
    b_r = nrm((F,), 0.1)
    b_z = nrm((F,), 0.1)
    b_in = nrm((F,), 0.1)
    b_hn = nrm((F,), 0.1)

    # 1x1 Conv1d (fc): weight [D, F, 1] -> pre-transposed [F, D]; bias [D].
    wfc_t = nrm((F, D), 0.15)
    bfc = nrm((D,), 0.1)
    ln2_g = 1.0 + nrm((D,), 0.05)
    ln2_b = nrm((D,), 0.05)

    params = dict(
        wqkv_t=jnp.stack([wq_t, wk_t, wv_t]),
        wo_t=wo_t,
        ln1=jnp.stack([ln1_g[None, :], ln1_b[None, :]]),
        wih_t=jnp.stack([wir_t, wiz_t, win_t]),
        whh_t=jnp.stack([whr_t, whz_t, whn_t]),
        bg=jnp.stack([b_r[None, :], b_z[None, :], b_in[None, :], b_hn[None, :]]),
        wfc_t=wfc_t,
        bfc=bfc[None, :],
        ln2=jnp.stack([ln2_g[None, :], ln2_b[None, :]]),
    )

    out = mha_gru_block(x, att_mask, params, n_heads=H)
    out = jax.block_until_ready(out)

    # ---- pure-JAX reference for verification ----
    def layer_norm(y, g, b, eps=1e-6):
        mu = jnp.mean(y, axis=-1, keepdims=True)
        var = jnp.mean((y - mu) ** 2, axis=-1, keepdims=True)
        return (y - mu) / jnp.sqrt(var + eps) * g + b

    def ref_forward(xx, mask):
        hd = D // H
        sc = 1.0 / math.sqrt(hd)
        q = xx @ wq_t
        k = xx @ wk_t
        v = xx @ wv_t
        qh = q.reshape(B, S, H, hd).transpose(0, 2, 1, 3) * sc
        kh = k.reshape(B, S, H, hd).transpose(0, 2, 1, 3)
        vh = v.reshape(B, S, H, hd).transpose(0, 2, 1, 3)
        s = jnp.einsum("bhqc,bhkc->bhqk", qh, kh) + mask[None, None]
        p = jax.nn.softmax(s, axis=-1)
        o = jnp.einsum("bhqk,bhkc->bhqc", p, vh)
        o = o.transpose(0, 2, 1, 3).reshape(B, S, D) @ wo_t
        y = layer_norm(xx + o, ln1_g, ln1_b)

        def gru_one(xb):
            def step(h, xt):
                r = jax.nn.sigmoid(xt @ wir_t + h @ whr_t + b_r)
                z = jax.nn.sigmoid(xt @ wiz_t + h @ whz_t + b_z)
                n = jnp.tanh(xt @ win_t + b_in + r * (h @ whn_t + b_hn))
                h = (1.0 - z) * n + z * h
                return h, h
            _, hs = lax.scan(step, jnp.zeros((F,), jnp.float32), xb)
            return hs

        g = jax.vmap(gru_one)(y)
        y2 = jnp.maximum(g, 0.0) @ wfc_t + bfc
        return layer_norm(y + y2, ln2_g, ln2_b)

    with jax.default_matmul_precision("highest"):
        ref = jax.block_until_ready(ref_forward(x, att_mask))

    assert out.shape == (B, S, D)
    assert out.dtype == jnp.float32
    assert bool(jnp.all(jnp.isfinite(out)))
    max_err = float(jnp.max(jnp.abs(out - ref)))
    assert max_err < 2e-3, f"mismatch vs reference: max abs err = {max_err}"

    print("KERNEL_OK")
</pallas_src>

<mosaic_0001>
module attributes {stable_mosaic.version = 11 : i64} {
  func.func @_mha_gru_kernel(%arg0: i32, %arg1: memref<1x16x32xf32, #tpu.memory_space<vmem>>, %arg2: memref<16x16xf32, #tpu.memory_space<vmem>>, %arg3: memref<3x32x32xf32, #tpu.memory_space<vmem>>, %arg4: memref<32x32xf32, #tpu.memory_space<vmem>>, %arg5: memref<2x1x32xf32, #tpu.memory_space<vmem>>, %arg6: memref<3x32x64xf32, #tpu.memory_space<vmem>>, %arg7: memref<3x64x64xf32, #tpu.memory_space<vmem>>, %arg8: memref<4x1x64xf32, #tpu.memory_space<vmem>>, %arg9: memref<64x32xf32, #tpu.memory_space<vmem>>, %arg10: memref<1x32xf32, #tpu.memory_space<vmem>>, %arg11: memref<2x1x32xf32, #tpu.memory_space<vmem>>, %arg12: memref<1x16x32xf32, #tpu.memory_space<vmem>>, %arg13: memref<16x64xf32, #tpu.memory_space<vmem>>, %arg14: memref<16x64xf32, #tpu.memory_space<vmem>>, %arg15: memref<16x64xf32, #tpu.memory_space<vmem>>, %arg16: memref<1x64xf32, #tpu.memory_space<vmem>>, %arg17: memref<16x64xf32, #tpu.memory_space<vmem>>) attributes {dimension_semantics = [#tpu.dimension_semantics<parallel>], iteration_bounds = array<i64: 2>, scalar_prefetch = 0 : i64, scratch_operands = 5 : i64, tpu.core_type = #tpu.core_type<tc>, window_params = [{transform_indices = @transform_0, window_bounds = array<i64: 1, 16, 32>}, {pipeline_mode = #tpu.pipeline_mode<synchronous>, transform_indices = @transform_1, window_bounds = array<i64: 16, 16>}, {pipeline_mode = #tpu.pipeline_mode<synchronous>, transform_indices = @transform_2, window_bounds = array<i64: 3, 32, 32>}, {pipeline_mode = #tpu.pipeline_mode<synchronous>, transform_indices = @transform_3, window_bounds = array<i64: 32, 32>}, {pipeline_mode = #tpu.pipeline_mode<synchronous>, transform_indices = @transform_4, window_bounds = array<i64: 2, 1, 32>}, {pipeline_mode = #tpu.pipeline_mode<synchronous>, transform_indices = @transform_5, window_bounds = array<i64: 3, 32, 64>}, {pipeline_mode = #tpu.pipeline_mode<synchronous>, transform_indices = @transform_6, window_bounds = array<i64: 3, 64, 64>}, {pipeline_mode = #tpu.pipeline_mode<synchronous>, transform_indices = @transform_7, window_bounds = array<i64: 4, 1, 64>}, {pipeline_mode = #tpu.pipeline_mode<synchronous>, transform_indices = @transform_8, window_bounds = array<i64: 64, 32>}, {pipeline_mode = #tpu.pipeline_mode<synchronous>, transform_indices = @transform_9, window_bounds = array<i64: 1, 32>}, {pipeline_mode = #tpu.pipeline_mode<synchronous>, transform_indices = @transform_10, window_bounds = array<i64: 2, 1, 32>}, {transform_indices = @transform_11, window_bounds = array<i64: 1, 16, 32>}]} {
    %c0 = arith.constant 0 : index
    %c0_0 = arith.constant 0 : index
    %c0_1 = arith.constant 0 : index
    %0 = vector.load %arg1[%c0, %c0_0, %c0_1] : memref<1x16x32xf32, #tpu.memory_space<vmem>>, vector<1x16x32xf32>
    %1 = vector.shape_cast %0 : vector<1x16x32xf32> to vector<16x32xf32>
    %c0_2 = arith.constant 0 : index
    %c0_3 = arith.constant 0 : index
    %2 = vector.load %arg2[%c0_2, %c0_3] : memref<16x16xf32, #tpu.memory_space<vmem>>, vector<16x16xf32>
    %c0_4 = arith.constant 0 : index
    %c0_5 = arith.constant 0 : index
    %c0_6 = arith.constant 0 : index
    %3 = vector.load %arg3[%c0_4, %c0_5, %c0_6] : memref<3x32x32xf32, #tpu.memory_space<vmem>>, vector<1x32x32xf32>
    %4 = vector.shape_cast %3 : vector<1x32x32xf32> to vector<32x32xf32>
    %cst = arith.constant dense<0.000000e+00> : vector<16x32xf32>
    %5 = tpu.matmul %1, %4, %cst {dimension_numbers = #tpu.dot_dimension_numbers<[1], [0], [0], [1], [0, 0, 1, 1], [], []>} : vector<16x32xf32>, vector<32x32xf32>, vector<16x32xf32> -> vector<16x32xf32>
    %c1 = arith.constant 1 : index
    %c0_7 = arith.constant 0 : index
    %c0_8 = arith.constant 0 : index
    %6 = vector.load %arg3[%c1, %c0_7, %c0_8] : memref<3x32x32xf32, #tpu.memory_space<vmem>>, vector<1x32x32xf32>
    %7 = vector.shape_cast %6 : vector<1x32x32xf32> to vector<32x32xf32>
    %cst_9 = arith.constant dense<0.000000e+00> : vector<16x32xf32>
    %8 = tpu.matmul %1, %7, %cst_9 {dimension_numbers = #tpu.dot_dimension_numbers<[1], [0], [0], [1], [0, 0, 1, 1], [], []>} : vector<16x32xf32>, vector<32x32xf32>, vector<16x32xf32> -> vector<16x32xf32>
    %c2 = arith.constant 2 : index
    %c0_10 = arith.constant 0 : index
    %c0_11 = arith.constant 0 : index
    %9 = vector.load %arg3[%c2, %c0_10, %c0_11] : memref<3x32x32xf32, #tpu.memory_space<vmem>>, vector<1x32x32xf32>
    %10 = vector.shape_cast %9 : vector<1x32x32xf32> to vector<32x32xf32>
    %cst_12 = arith.constant dense<0.000000e+00> : vector<16x32xf32>
    %11 = tpu.matmul %1, %10, %cst_12 {dimension_numbers = #tpu.dot_dimension_numbers<[1], [0], [0], [1], [0, 0, 1, 1], [], []>} : vector<16x32xf32>, vector<32x32xf32>, vector<16x32xf32> -> vector<16x32xf32>
    %12 = vector.extract_strided_slice %5 {offsets = [0, 0], sizes = [16, 8], strides = [1, 1]} : vector<16x32xf32> to vector<16x8xf32>
    %cst_13 = arith.constant 0.353553385 : f32
    %13 = vector.broadcast %cst_13 : f32 to vector<16x8xf32>
    %14 = arith.mulf %12, %13 : vector<16x8xf32>
    %15 = vector.extract_strided_slice %8 {offsets = [0, 0], sizes = [16, 8], strides = [1, 1]} : vector<16x32xf32> to vector<16x8xf32>
    %16 = vector.extract_strided_slice %11 {offsets = [0, 0], sizes = [16, 8], strides = [1, 1]} : vector<16x32xf32> to vector<16x8xf32>
    "tpu.trace_start"() <{level = 10 : i32, message = "qc,kc->qk"}> : () -> ()
    %cst_14 = arith.constant dense<0.000000e+00> : vector<16x16xf32>
    %17 = tpu.matmul %14, %15, %cst_14 {dimension_numbers = #tpu.dot_dimension_numbers<[1], [1], [0], [0], [0, 0, 1, 0], [], []>} : vector<16x8xf32>, vector<16x8xf32>, vector<16x16xf32> -> vector<16x16xf32>
    "tpu.trace_stop"() : () -> ()
    %18 = arith.addf %17, %2 : vector<16x16xf32>
    %cst_15 = arith.constant dense<0xFF800000> : vector<16xf32>
    %19 = vector.multi_reduction <maximumf>, %18, %cst_15 [1] : vector<16x16xf32> to vector<16xf32>
    %20 = vector.shape_cast %19 : vector<16xf32> to vector<16x1xf32>
    %21 = vector.broadcast %20 : vector<16x1xf32> to vector<16x16xf32>
    %22 = arith.subf %18, %21 : vector<16x16xf32>
    %23 = math.exp %22 : vector<16x16xf32>
    %cst_16 = arith.constant dense<0.000000e+00> : vector<16xf32>
    %24 = vector.multi_reduction <add>, %23, %cst_16 [1] : vector<16x16xf32> to vector<16xf32>
    %25 = vector.shape_cast %24 : vector<16xf32> to vector<16x1xf32>
    %26 = vector.broadcast %25 : vector<16x1xf32> to vector<16x16xf32>
    %27 = arith.divf %23, %26 : vector<16x16xf32>
    %cst_17 = arith.constant dense<0.000000e+00> : vector<16x8xf32>
    %28 = tpu.matmul %27, %16, %cst_17 {dimension_numbers = #tpu.dot_dimension_numbers<[1], [0], [0], [1], [0, 0, 1, 1], [], []>} : vector<16x16xf32>, vector<16x8xf32>, vector<16x8xf32> -> vector<16x8xf32>
    %29 = vector.extract_strided_slice %5 {offsets = [0, 8], sizes = [16, 8], strides = [1, 1]} : vector<16x32xf32> to vector<16x8xf32>
    %cst_18 = arith.constant 0.353553385 : f32
    %30 = vector.broadcast %cst_18 : f32 to vector<16x8xf32>
    %31 = arith.mulf %29, %30 : vector<16x8xf32>
    %32 = vector.extract_strided_slice %8 {offsets = [0, 8], sizes = [16, 8], strides = [1, 1]} : vector<16x32xf32> to vector<16x8xf32>
    %33 = vector.extract_strided_slice %11 {offsets = [0, 8], sizes = [16, 8], strides = [1, 1]} : vector<16x32xf32> to vector<16x8xf32>
    "tpu.trace_start"() <{level = 10 : i32, message = "qc,kc->qk"}> : () -> ()
    %cst_19 = arith.constant dense<0.000000e+00> : vector<16x16xf32>
    %34 = tpu.matmul %31, %32, %cst_19 {dimension_numbers = #tpu.dot_dimension_numbers<[1], [1], [0], [0], [0, 0, 1, 0], [], []>} : vector<16x8xf32>, vector<16x8xf32>, vector<16x16xf32> -> vector<16x16xf32>
    "tpu.trace_stop"() : () -> ()
    %35 = arith.addf %34, %2 : vector<16x16xf32>
    %cst_20 = arith.constant dense<0xFF800000> : vector<16xf32>
    %36 = vector.multi_reduction <maximumf>, %35, %cst_20 [1] : vector<16x16xf32> to vector<16xf32>
    %37 = vector.shape_cast %36 : vector<16xf32> to vector<16x1xf32>
    %38 = vector.broadcast %37 : vector<16x1xf32> to vector<16x16xf32>
    %39 = arith.subf %35, %38 : vector<16x16xf32>
    %40 = math.exp %39 : vector<16x16xf32>
    %cst_21 = arith.constant dense<0.000000e+00> : vector<16xf32>
    %41 = vector.multi_reduction <add>, %40, %cst_21 [1] : vector<16x16xf32> to vector<16xf32>
    %42 = vector.shape_cast %41 : vector<16xf32> to vector<16x1xf32>
    %43 = vector.broadcast %42 : vector<16x1xf32> to vector<16x16xf32>
    %44 = arith.divf %40, %43 : vector<16x16xf32>
    %cst_22 = arith.constant dense<0.000000e+00> : vector<16x8xf32>
    %45 = tpu.matmul %44, %33, %cst_22 {dimension_numbers = #tpu.dot_dimension_numbers<[1], [0], [0], [1], [0, 0, 1, 1], [], []>} : vector<16x16xf32>, vector<16x8xf32>, vector<16x8xf32> -> vector<16x8xf32>
    %46 = vector.extract_strided_slice %5 {offsets = [0, 16], sizes = [16, 8], strides = [1, 1]} : vector<16x32xf32> to vector<16x8xf32>
    %cst_23 = arith.constant 0.353553385 : f32
    %47 = vector.broadcast %cst_23 : f32 to vector<16x8xf32>
    %48 = arith.mulf %46, %47 : vector<16x8xf32>
    %49 = vector.extract_strided_slice %8 {offsets = [0, 16], sizes = [16, 8], strides = [1, 1]} : vector<16x32xf32> to vector<16x8xf32>
    %50 = vector.extract_strided_slice %11 {offsets = [0, 16], sizes = [16, 8], strides = [1, 1]} : vector<16x32xf32> to vector<16x8xf32>
    "tpu.trace_start"() <{level = 10 : i32, message = "qc,kc->qk"}> : () -> ()
    %cst_24 = arith.constant dense<0.000000e+00> : vector<16x16xf32>
    %51 = tpu.matmul %48, %49, %cst_24 {dimension_numbers = #tpu.dot_dimension_numbers<[1], [1], [0], [0], [0, 0, 1, 0], [], []>} : vector<16x8xf32>, vector<16x8xf32>, vector<16x16xf32> -> vector<16x16xf32>
    "tpu.trace_stop"() : () -> ()
    %52 = arith.addf %51, %2 : vector<16x16xf32>
    %cst_25 = arith.constant dense<0xFF800000> : vector<16xf32>
    %53 = vector.multi_reduction <maximumf>, %52, %cst_25 [1] : vector<16x16xf32> to vector<16xf32>
    %54 = vector.shape_cast %53 : vector<16xf32> to vector<16x1xf32>
    %55 = vector.broadcast %54 : vector<16x1xf32> to vector<16x16xf32>
    %56 = arith.subf %52, %55 : vector<16x16xf32>
    %57 = math.exp %56 : vector<16x16xf32>
    %cst_26 = arith.constant dense<0.000000e+00> : vector<16xf32>
    %58 = vector.multi_reduction <add>, %57, %cst_26 [1] : vector<16x16xf32> to vector<16xf32>
    %59 = vector.shape_cast %58 : vector<16xf32> to vector<16x1xf32>
    %60 = vector.broadcast %59 : vector<16x1xf32> to vector<16x16xf32>
    %61 = arith.divf %57, %60 : vector<16x16xf32>
    %cst_27 = arith.constant dense<0.000000e+00> : vector<16x8xf32>
    %62 = tpu.matmul %61, %50, %cst_27 {dimension_numbers = #tpu.dot_dimension_numbers<[1], [0], [0], [1], [0, 0, 1, 1], [], []>} : vector<16x16xf32>, vector<16x8xf32>, vector<16x8xf32> -> vector<16x8xf32>
    %63 = vector.extract_strided_slice %5 {offsets = [0, 24], sizes = [16, 8], strides = [1, 1]} : vector<16x32xf32> to vector<16x8xf32>
    %cst_28 = arith.constant 0.353553385 : f32
    %64 = vector.broadcast %cst_28 : f32 to vector<16x8xf32>
    %65 = arith.mulf %63, %64 : vector<16x8xf32>
    %66 = vector.extract_strided_slice %8 {offsets = [0, 24], sizes = [16, 8], strides = [1, 1]} : vector<16x32xf32> to vector<16x8xf32>
    %67 = vector.extract_strided_slice %11 {offsets = [0, 24], sizes = [16, 8], strides = [1, 1]} : vector<16x32xf32> to vector<16x8xf32>
    "tpu.trace_start"() <{level = 10 : i32, message = "qc,kc->qk"}> : () -> ()
    %cst_29 = arith.constant dense<0.000000e+00> : vector<16x16xf32>
    %68 = tpu.matmul %65, %66, %cst_29 {dimension_numbers = #tpu.dot_dimension_numbers<[1], [1], [0], [0], [0, 0, 1, 0], [], []>} : vector<16x8xf32>, vector<16x8xf32>, vector<16x16xf32> -> vector<16x16xf32>
    "tpu.trace_stop"() : () -> ()
    %69 = arith.addf %68, %2 : vector<16x16xf32>
    %cst_30 = arith.constant dense<0xFF800000> : vector<16xf32>
    %70 = vector.multi_reduction <maximumf>, %69, %cst_30 [1] : vector<16x16xf32> to vector<16xf32>
    %71 = vector.shape_cast %70 : vector<16xf32> to vector<16x1xf32>
    %72 = vector.broadcast %71 : vector<16x1xf32> to vector<16x16xf32>
    %73 = arith.subf %69, %72 : vector<16x16xf32>
    %74 = math.exp %73 : vector<16x16xf32>
    %cst_31 = arith.constant dense<0.000000e+00> : vector<16xf32>
    %75 = vector.multi_reduction <add>, %74, %cst_31 [1] : vector<16x16xf32> to vector<16xf32>
    %76 = vector.shape_cast %75 : vector<16xf32> to vector<16x1xf32>
    %77 = vector.broadcast %76 : vector<16x1xf32> to vector<16x16xf32>
    %78 = arith.divf %74, %77 : vector<16x16xf32>
    %cst_32 = arith.constant dense<0.000000e+00> : vector<16x8xf32>
    %79 = tpu.matmul %78, %67, %cst_32 {dimension_numbers = #tpu.dot_dimension_numbers<[1], [0], [0], [1], [0, 0, 1, 1], [], []>} : vector<16x16xf32>, vector<16x8xf32>, vector<16x8xf32> -> vector<16x8xf32>
    %80 = tpu.concatenate %28, %45, %62, %79 in 1 : vector<16x8xf32>, vector<16x8xf32>, vector<16x8xf32>, vector<16x8xf32> -> vector<16x32xf32>
    %c0_33 = arith.constant 0 : index
    %c0_34 = arith.constant 0 : index
    %81 = vector.load %arg4[%c0_33, %c0_34] : memref<32x32xf32, #tpu.memory_space<vmem>>, vector<32x32xf32>
    %cst_35 = arith.constant dense<0.000000e+00> : vector<16x32xf32>
    %82 = tpu.matmul %80, %81, %cst_35 {dimension_numbers = #tpu.dot_dimension_numbers<[1], [0], [0], [1], [0, 0, 1, 1], [], []>} : vector<16x32xf32>, vector<32x32xf32>, vector<16x32xf32> -> vector<16x32xf32>
    %83 = arith.addf %1, %82 : vector<16x32xf32>
    %c0_36 = arith.constant 0 : index
    %c0_37 = arith.constant 0 : index
    %c0_38 = arith.constant 0 : index
    %84 = vector.load %arg5[%c0_36, %c0_37, %c0_38] : memref<2x1x32xf32, #tpu.memory_space<vmem>>, vector<1x1x32xf32>
    %85 = vector.shape_cast %84 : vector<1x1x32xf32> to vector<1x32xf32>
    %c1_39 = arith.constant 1 : index
    %c0_40 = arith.constant 0 : index
    %c0_41 = arith.constant 0 : index
    %86 = vector.load %arg5[%c1_39, %c0_40, %c0_41] : memref<2x1x32xf32, #tpu.memory_space<vmem>>, vector<1x1x32xf32>
    %87 = vector.shape_cast %86 : vector<1x1x32xf32> to vector<1x32xf32>
    %cst_42 = arith.constant dense<0.000000e+00> : vector<16xf32>
    %88 = vector.multi_reduction <add>, %83, %cst_42 [1] : vector<16x32xf32> to vector<16xf32>
    %89 = vector.shape_cast %88 : vector<16xf32> to vector<16x1xf32>
    %cst_43 = arith.constant 3.200000e+01 : f32
    %90 = vector.broadcast %cst_43 : f32 to vector<16x1xf32>
    %91 = arith.divf %89, %90 : vector<16x1xf32>
    %92 = vector.broadcast %91 : vector<16x1xf32> to vector<16x32xf32>
    %93 = arith.subf %83, %92 : vector<16x32xf32>
    %94 = arith.mulf %93, %93 : vector<16x32xf32>
    %cst_44 = arith.constant dense<0.000000e+00> : vector<16xf32>
    %95 = vector.multi_reduction <add>, %94, %cst_44 [1] : vector<16x32xf32> to vector<16xf32>
    %96 = vector.shape_cast %95 : vector<16xf32> to vector<16x1xf32>
    %cst_45 = arith.constant 3.200000e+01 : f32
    %97 = vector.broadcast %cst_45 : f32 to vector<16x1xf32>
    %98 = arith.divf %96, %97 : vector<16x1xf32>
    %99 = vector.broadcast %91 : vector<16x1xf32> to vector<16x32xf32>
    %100 = arith.subf %83, %99 : vector<16x32xf32>
    %cst_46 = arith.constant 9.99999997E-7 : f32
    %101 = vector.broadcast %cst_46 : f32 to vector<16x1xf32>
    %102 = arith.addf %98, %101 : vector<16x1xf32>
    %103 = math.rsqrt %102 : vector<16x1xf32>
    %104 = vector.broadcast %103 : vector<16x1xf32> to vector<16x32xf32>
    %105 = arith.mulf %100, %104 : vector<16x32xf32>
    %106 = vector.broadcast %85 : vector<1x32xf32> to vector<16x32xf32>
    %107 = arith.mulf %105, %106 : vector<16x32xf32>
    %108 = vector.broadcast %87 : vector<1x32xf32> to vector<16x32xf32>
    %109 = arith.addf %107, %108 : vector<16x32xf32>
    %c0_47 = arith.constant 0 : index
    %c0_48 = arith.constant 0 : index
    %c0_49 = arith.constant 0 : index
    %110 = vector.load %arg6[%c0_47, %c0_48, %c0_49] : memref<3x32x64xf32, #tpu.memory_space<vmem>>, vector<1x32x64xf32>
    %111 = vector.shape_cast %110 : vector<1x32x64xf32> to vector<32x64xf32>
    %cst_50 = arith.constant dense<0.000000e+00> : vector<16x64xf32>
    %112 = tpu.matmul %109, %111, %cst_50 {dimension_numbers = #tpu.dot_dimension_numbers<[1], [0], [0], [1], [0, 0, 1, 1], [], []>} : vector<16x32xf32>, vector<32x64xf32>, vector<16x64xf32> -> vector<16x64xf32>
    %c0_51 = arith.constant 0 : index
    %c0_52 = arith.constant 0 : index
    %c0_53 = arith.constant 0 : index
    %113 = vector.load %arg8[%c0_51, %c0_52, %c0_53] : memref<4x1x64xf32, #tpu.memory_space<vmem>>, vector<1x1x64xf32>
    %114 = vector.shape_cast %113 : vector<1x1x64xf32> to vector<1x64xf32>
    %115 = vector.broadcast %114 : vector<1x64xf32> to vector<16x64xf32>
    %116 = arith.addf %112, %115 : vector<16x64xf32>
    %c0_54 = arith.constant 0 : index
    %c0_55 = arith.constant 0 : index
    %117 = vector.load %arg13[%c0_54, %c0_55] : memref<16x64xf32, #tpu.memory_space<vmem>>, vector<16x64xf32>
    tpu.vector_store %arg13[%c0_54, %c0_55], %116 {strides = array<i32>} : memref<16x64xf32, #tpu.memory_space<vmem>>, vector<16x64xf32>,
    %c1_56 = arith.constant 1 : index
    %c0_57 = arith.constant 0 : index
    %c0_58 = arith.constant 0 : index
    %118 = vector.load %arg6[%c1_56, %c0_57, %c0_58] : memref<3x32x64xf32, #tpu.memory_space<vmem>>, vector<1x32x64xf32>
    %119 = vector.shape_cast %118 : vector<1x32x64xf32> to vector<32x64xf32>
    %cst_59 = arith.constant dense<0.000000e+00> : vector<16x64xf32>
    %120 = tpu.matmul %109, %119, %cst_59 {dimension_numbers = #tpu.dot_dimension_numbers<[1], [0], [0], [1], [0, 0, 1, 1], [], []>} : vector<16x32xf32>, vector<32x64xf32>, vector<16x64xf32> -> vector<16x64xf32>
    %c1_60 = arith.constant 1 : index
    %c0_61 = arith.constant 0 : index
    %c0_62 = arith.constant 0 : index
    %121 = vector.load %arg8[%c1_60, %c0_61, %c0_62] : memref<4x1x64xf32, #tpu.memory_space<vmem>>, vector<1x1x64xf32>
    %122 = vector.shape_cast %121 : vector<1x1x64xf32> to vector<1x64xf32>
    %123 = vector.broadcast %122 : vector<1x64xf32> to vector<16x64xf32>
    %124 = arith.addf %120, %123 : vector<16x64xf32>
    %c0_63 = arith.constant 0 : index
    %c0_64 = arith.constant 0 : index
    %125 = vector.load %arg14[%c0_63, %c0_64] : memref<16x64xf32, #tpu.memory_space<vmem>>, vector<16x64xf32>
    tpu.vector_store %arg14[%c0_63, %c0_64], %124 {strides = array<i32>} : memref<16x64xf32, #tpu.memory_space<vmem>>, vector<16x64xf32>,
    %c2_65 = arith.constant 2 : index
    %c0_66 = arith.constant 0 : index
    %c0_67 = arith.constant 0 : index
    %126 = vector.load %arg6[%c2_65, %c0_66, %c0_67] : memref<3x32x64xf32, #tpu.memory_space<vmem>>, vector<1x32x64xf32>
    %127 = vector.shape_cast %126 : vector<1x32x64xf32> to vector<32x64xf32>
    %cst_68 = arith.constant dense<0.000000e+00> : vector<16x64xf32>
    %128 = tpu.matmul %109, %127, %cst_68 {dimension_numbers = #tpu.dot_dimension_numbers<[1], [0], [0], [1], [0, 0, 1, 1], [], []>} : vector<16x32xf32>, vector<32x64xf32>, vector<16x64xf32> -> vector<16x64xf32>
    %c2_69 = arith.constant 2 : index
    %c0_70 = arith.constant 0 : index
    %c0_71 = arith.constant 0 : index
    %129 = vector.load %arg8[%c2_69, %c0_70, %c0_71] : memref<4x1x64xf32, #tpu.memory_space<vmem>>, vector<1x1x64xf32>
    %130 = vector.shape_cast %129 : vector<1x1x64xf32> to vector<1x64xf32>
    %131 = vector.broadcast %130 : vector<1x64xf32> to vector<16x64xf32>
    %132 = arith.addf %128, %131 : vector<16x64xf32>
    %c0_72 = arith.constant 0 : index
    %c0_73 = arith.constant 0 : index
    %133 = vector.load %arg15[%c0_72, %c0_73] : memref<16x64xf32, #tpu.memory_space<vmem>>, vector<16x64xf32>
    tpu.vector_store %arg15[%c0_72, %c0_73], %132 {strides = array<i32>} : memref<16x64xf32, #tpu.memory_space<vmem>>, vector<16x64xf32>,
    %cst_74 = arith.constant 0.000000e+00 : f32
    %134 = vector.broadcast %cst_74 : f32 to vector<1x64xf32>
    %c0_75 = arith.constant 0 : index
    %c0_76 = arith.constant 0 : index
    %135 = vector.load %arg16[%c0_75, %c0_76] : memref<1x64xf32, #tpu.memory_space<vmem>>, vector<1x64xf32>
    tpu.vector_store %arg16[%c0_75, %c0_76], %134 {strides = array<i32>} : memref<1x64xf32, #tpu.memory_space<vmem>>, vector<1x64xf32>,
    %c0_77 = arith.constant 0 : index
    %c0_78 = arith.constant 0 : index
    %c0_79 = arith.constant 0 : index
    %136 = vector.load %arg7[%c0_77, %c0_78, %c0_79] : memref<3x64x64xf32, #tpu.memory_space<vmem>>, vector<1x64x64xf32>
    %137 = vector.shape_cast %136 : vector<1x64x64xf32> to vector<64x64xf32>
    %c1_80 = arith.constant 1 : index
    %c0_81 = arith.constant 0 : index
    %c0_82 = arith.constant 0 : index
    %138 = vector.load %arg7[%c1_80, %c0_81, %c0_82] : memref<3x64x64xf32, #tpu.memory_space<vmem>>, vector<1x64x64xf32>
    %139 = vector.shape_cast %138 : vector<1x64x64xf32> to vector<64x64xf32>
    %c2_83 = arith.constant 2 : index
    %c0_84 = arith.constant 0 : index
    %c0_85 = arith.constant 0 : index
    %140 = vector.load %arg7[%c2_83, %c0_84, %c0_85] : memref<3x64x64xf32, #tpu.memory_space<vmem>>, vector<1x64x64xf32>
    %141 = vector.shape_cast %140 : vector<1x64x64xf32> to vector<64x64xf32>
    %c3 = arith.constant 3 : index
    %c0_86 = arith.constant 0 : index
    %c0_87 = arith.constant 0 : index
    %142 = vector.load %arg8[%c3, %c0_86, %c0_87] : memref<4x1x64xf32, #tpu.memory_space<vmem>>, vector<1x1x64xf32>
    %143 = vector.shape_cast %142 : vector<1x1x64xf32> to vector<1x64xf32>
    %c0_i32 = arith.constant 0 : i32
    %c16_i32 = arith.constant 16 : i32
    %144 = arith.addi %c0_i32, %c16_i32 : i32
    %c1_i32 = arith.constant 1 : i32
    scf.for %arg18 = %c0_i32 to %144 step %c1_i32  : i32 {
      %c1_i32_111 = arith.constant 1 : i32
      %183 = arith.muli %arg18, %c1_i32_111 : i32
      %c0_i32_112 = arith.constant 0 : i32
      %184 = arith.addi %c0_i32_112, %183 : i32
      %c0_113 = arith.constant 0 : index
      %c0_114 = arith.constant 0 : index
      %185 = vector.load %arg16[%c0_113, %c0_114] : memref<1x64xf32, #tpu.memory_space<vmem>>, vector<1x64xf32>
      %186 = arith.index_cast %184 : i32 to index
      %c0_115 = arith.constant 0 : index
      %187 = vector.load %arg13[%186, %c0_115] : memref<16x64xf32, #tpu.memory_space<vmem>>, vector<1x64xf32>
      %cst_116 = arith.constant dense<0.000000e+00> : vector<1x64xf32>
      %188 = tpu.matmul %185, %137, %cst_116 {dimension_numbers = #tpu.dot_dimension_numbers<[1], [0], [0], [1], [0, 0, 1, 1], [], []>} : vector<1x64xf32>, vector<64x64xf32>, vector<1x64xf32> -> vector<1x64xf32>
      %189 = arith.addf %187, %188 : vector<1x64xf32>
      %190 = arith.negf %189 : vector<1x64xf32>
      %191 = math.exp %190 : vector<1x64xf32>
      %cst_117 = arith.constant 1.000000e+00 : f32
      %192 = vector.broadcast %cst_117 : f32 to vector<1x64xf32>
      %193 = arith.addf %192, %191 : vector<1x64xf32>
      %194 = arith.divf %192, %193 : vector<1x64xf32>
      %195 = arith.index_cast %184 : i32 to index
      %c0_118 = arith.constant 0 : index
      %196 = vector.load %arg14[%195, %c0_118] : memref<16x64xf32, #tpu.memory_space<vmem>>, vector<1x64xf32>
      %cst_119 = arith.constant dense<0.000000e+00> : vector<1x64xf32>
      %197 = tpu.matmul %185, %139, %cst_119 {dimension_numbers = #tpu.dot_dimension_numbers<[1], [0], [0], [1], [0, 0, 1, 1], [], []>} : vector<1x64xf32>, vector<64x64xf32>, vector<1x64xf32> -> vector<1x64xf32>
      %198 = arith.addf %196, %197 : vector<1x64xf32>
      %199 = arith.negf %198 : vector<1x64xf32>
      %200 = math.exp %199 : vector<1x64xf32>
      %cst_120 = arith.constant 1.000000e+00 : f32
      %201 = vector.broadcast %cst_120 : f32 to vector<1x64xf32>
      %202 = arith.addf %201, %200 : vector<1x64xf32>
      %203 = arith.divf %201, %202 : vector<1x64xf32>
      %204 = arith.index_cast %184 : i32 to index
      %c0_121 = arith.constant 0 : index
      %205 = vector.load %arg15[%204, %c0_121] : memref<16x64xf32, #tpu.memory_space<vmem>>, vector<1x64xf32>
      %cst_122 = arith.constant dense<0.000000e+00> : vector<1x64xf32>
      %206 = tpu.matmul %185, %141, %cst_122 {dimension_numbers = #tpu.dot_dimension_numbers<[1], [0], [0], [1], [0, 0, 1, 1], [], []>} : vector<1x64xf32>, vector<64x64xf32>, vector<1x64xf32> -> vector<1x64xf32>
      %207 = arith.addf %206, %143 : vector<1x64xf32>
      %208 = arith.mulf %194, %207 : vector<1x64xf32>
      %209 = arith.addf %205, %208 : vector<1x64xf32>
      %210 = math.tanh %209 : vector<1x64xf32>
      %cst_123 = arith.constant 1.000000e+00 : f32
      %211 = vector.broadcast %cst_123 : f32 to vector<1x64xf32>
      %212 = arith.subf %211, %203 : vector<1x64xf32>
      %213 = arith.mulf %212, %210 : vector<1x64xf32>
      %214 = arith.mulf %203, %185 : vector<1x64xf32>
      %215 = arith.addf %213, %214 : vector<1x64xf32>
      %c0_124 = arith.constant 0 : index
      %c0_125 = arith.constant 0 : index
      %216 = vector.load %arg16[%c0_124, %c0_125] : memref<1x64xf32, #tpu.memory_space<vmem>>, vector<1x64xf32>
      tpu.vector_store %arg16[%c0_124, %c0_125], %215 {strides = array<i32>} : memref<1x64xf32, #tpu.memory_space<vmem>>, vector<1x64xf32>,
      %217 = arith.index_cast %184 : i32 to index
      %c0_126 = arith.constant 0 : index
      %218 = vector.load %arg17[%217, %c0_126] : memref<16x64xf32, #tpu.memory_space<vmem>>, vector<1x64xf32>
      tpu.vector_store %arg17[%217, %c0_126], %215 {strides = array<i32>} : memref<16x64xf32, #tpu.memory_space<vmem>>, vector<1x64xf32>,
    }
    %c16_i32_88 = arith.constant 16 : i32
    %c0_89 = arith.constant 0 : index
    %c0_90 = arith.constant 0 : index
    %145 = vector.load %arg17[%c0_89, %c0_90] : memref<16x64xf32, #tpu.memory_space<vmem>>, vector<16x64xf32>
    %cst_91 = arith.constant 0.000000e+00 : f32
    %146 = vector.broadcast %cst_91 : f32 to vector<16x64xf32>
    %147 = arith.maximumf %145, %146 : vector<16x64xf32>
    %c0_92 = arith.constant 0 : index
    %c0_93 = arith.constant 0 : index
    %148 = vector.load %arg9[%c0_92, %c0_93] : memref<64x32xf32, #tpu.memory_space<vmem>>, vector<64x32xf32>
    %cst_94 = arith.constant dense<0.000000e+00> : vector<16x32xf32>
    %149 = tpu.matmul %147, %148, %cst_94 {dimension_numbers = #tpu.dot_dimension_numbers<[1], [0], [0], [1], [0, 0, 1, 1], [], []>} : vector<16x64xf32>, vector<64x32xf32>, vector<16x32xf32> -> vector<16x32xf32>
    %c0_95 = arith.constant 0 : index
    %c0_96 = arith.constant 0 : index
    %150 = vector.load %arg10[%c0_95, %c0_96] : memref<1x32xf32, #tpu.memory_space<vmem>>, vector<1x32xf32>
    %151 = vector.broadcast %150 : vector<1x32xf32> to vector<16x32xf32>
    %152 = arith.addf %149, %151 : vector<16x32xf32>
    %153 = arith.addf %109, %152 : vector<16x32xf32>
    %c0_97 = arith.constant 0 : index
    %c0_98 = arith.constant 0 : index
    %c0_99 = arith.constant 0 : index
    %154 = vector.load %arg11[%c0_97, %c0_98, %c0_99] : memref<2x1x32xf32, #tpu.memory_space<vmem>>, vector<1x1x32xf32>
    %155 = vector.shape_cast %154 : vector<1x1x32xf32> to vector<1x32xf32>
    %c1_100 = arith.constant 1 : index
    %c0_101 = arith.constant 0 : index
    %c0_102 = arith.constant 0 : index
    %156 = vector.load %arg11[%c1_100, %c0_101, %c0_102] : memref<2x1x32xf32, #tpu.memory_space<vmem>>, vector<1x1x32xf32>
    %157 = vector.shape_cast %156 : vector<1x1x32xf32> to vector<1x32xf32>
    %cst_103 = arith.constant dense<0.000000e+00> : vector<16xf32>
    %158 = vector.multi_reduction <add>, %153, %cst_103 [1] : vector<16x32xf32> to vector<16xf32>
    %159 = vector.shape_cast %158 : vector<16xf32> to vector<16x1xf32>
    %cst_104 = arith.constant 3.200000e+01 : f32
    %160 = vector.broadcast %cst_104 : f32 to vector<16x1xf32>
    %161 = arith.divf %159, %160 : vector<16x1xf32>
    %162 = vector.broadcast %161 : vector<16x1xf32> to vector<16x32xf32>
    %163 = arith.subf %153, %162 : vector<16x32xf32>
    %164 = arith.mulf %163, %163 : vector<16x32xf32>
    %cst_105 = arith.constant dense<0.000000e+00> : vector<16xf32>
    %165 = vector.multi_reduction <add>, %164, %cst_105 [1] : vector<16x32xf32> to vector<16xf32>
    %166 = vector.shape_cast %165 : vector<16xf32> to vector<16x1xf32>
    %cst_106 = arith.constant 3.200000e+01 : f32
    %167 = vector.broadcast %cst_106 : f32 to vector<16x1xf32>
    %168 = arith.divf %166, %167 : vector<16x1xf32>
    %169 = vector.broadcast %161 : vector<16x1xf32> to vector<16x32xf32>
    %170 = arith.subf %153, %169 : vector<16x32xf32>
    %cst_107 = arith.constant 9.99999997E-7 : f32
    %171 = vector.broadcast %cst_107 : f32 to vector<16x1xf32>
    %172 = arith.addf %168, %171 : vector<16x1xf32>
    %173 = math.rsqrt %172 : vector<16x1xf32>
    %174 = vector.broadcast %173 : vector<16x1xf32> to vector<16x32xf32>
    %175 = arith.mulf %170, %174 : vector<16x32xf32>
    %176 = vector.broadcast %155 : vector<1x32xf32> to vector<16x32xf32>
    %177 = arith.mulf %175, %176 : vector<16x32xf32>
    %178 = vector.broadcast %157 : vector<1x32xf32> to vector<16x32xf32>
    %179 = arith.addf %177, %178 : vector<16x32xf32>
    %c0_108 = arith.constant 0 : index
    %c0_109 = arith.constant 0 : index
    %c0_110 = arith.constant 0 : index
    %180 = vector.load %arg12[%c0_108, %c0_109, %c0_110] : memref<1x16x32xf32, #tpu.memory_space<vmem>>, vector<1x16x32xf32>
    %181 = vector.shape_cast %180 : vector<1x16x32xf32> to vector<16x32xf32>
    %182 = vector.shape_cast %179 : vector<16x32xf32> to vector<1x16x32xf32>
    tpu.vector_store %arg12[%c0_108, %c0_109, %c0_110], %182 {strides = array<i32>} : memref<1x16x32xf32, #tpu.memory_space<vmem>>, vector<1x16x32xf32>,
    return
  }
  func.func @transform_0(%arg0: i32) -> (i32, i32, i32) {
    %c0_i32 = arith.constant 0 : i32
    %c0_i32_0 = arith.constant 0 : i32
    %c0_i32_1 = arith.constant 0 : i32
    return %arg0, %c0_i32, %c0_i32_0 : i32, i32, i32
  }
  func.func @transform_1(%arg0: i32) -> (i32, i32) {
    %c0_i32 = arith.constant 0 : i32
    %c0_i32_0 = arith.constant 0 : i32
    %c0_i32_1 = arith.constant 0 : i32
    return %c0_i32, %c0_i32_0 : i32, i32
  }
  func.func @transform_2(%arg0: i32) -> (i32, i32, i32) {
    %c0_i32 = arith.constant 0 : i32
    %c0_i32_0 = arith.constant 0 : i32
    %c0_i32_1 = arith.constant 0 : i32
    %c0_i32_2 = arith.constant 0 : i32
    return %c0_i32, %c0_i32_0, %c0_i32_1 : i32, i32, i32
  }
  func.func @transform_3(%arg0: i32) -> (i32, i32) {
    %c0_i32 = arith.constant 0 : i32
    %c0_i32_0 = arith.constant 0 : i32
    %c0_i32_1 = arith.constant 0 : i32
    return %c0_i32, %c0_i32_0 : i32, i32
  }
  func.func @transform_4(%arg0: i32) -> (i32, i32, i32) {
    %c0_i32 = arith.constant 0 : i32
    %c0_i32_0 = arith.constant 0 : i32
    %c0_i32_1 = arith.constant 0 : i32
    %c0_i32_2 = arith.constant 0 : i32
    return %c0_i32, %c0_i32_0, %c0_i32_1 : i32, i32, i32
  }
  func.func @transform_5(%arg0: i32) -> (i32, i32, i32) {
    %c0_i32 = arith.constant 0 : i32
    %c0_i32_0 = arith.constant 0 : i32
    %c0_i32_1 = arith.constant 0 : i32
    %c0_i32_2 = arith.constant 0 : i32
    return %c0_i32, %c0_i32_0, %c0_i32_1 : i32, i32, i32
  }
  func.func @transform_6(%arg0: i32) -> (i32, i32, i32) {
    %c0_i32 = arith.constant 0 : i32
    %c0_i32_0 = arith.constant 0 : i32
    %c0_i32_1 = arith.constant 0 : i32
    %c0_i32_2 = arith.constant 0 : i32
    return %c0_i32, %c0_i32_0, %c0_i32_1 : i32, i32, i32
  }
  func.func @transform_7(%arg0: i32) -> (i32, i32, i32) {
    %c0_i32 = arith.constant 0 : i32
    %c0_i32_0 = arith.constant 0 : i32
    %c0_i32_1 = arith.constant 0 : i32
    %c0_i32_2 = arith.constant 0 : i32
    return %c0_i32, %c0_i32_0, %c0_i32_1 : i32, i32, i32
  }
  func.func @transform_8(%arg0: i32) -> (i32, i32) {
    %c0_i32 = arith.constant 0 : i32
    %c0_i32_0 = arith.constant 0 : i32
    %c0_i32_1 = arith.constant 0 : i32
    return %c0_i32, %c0_i32_0 : i32, i32
  }
  func.func @transform_9(%arg0: i32) -> (i32, i32) {
    %c0_i32 = arith.constant 0 : i32
    %c0_i32_0 = arith.constant 0 : i32
    %c0_i32_1 = arith.constant 0 : i32
    return %c0_i32, %c0_i32_0 : i32, i32
  }
  func.func @transform_10(%arg0: i32) -> (i32, i32, i32) {
    %c0_i32 = arith.constant 0 : i32
    %c0_i32_0 = arith.constant 0 : i32
    %c0_i32_1 = arith.constant 0 : i32
    %c0_i32_2 = arith.constant 0 : i32
    return %c0_i32, %c0_i32_0, %c0_i32_1 : i32, i32, i32
  }
  func.func @transform_11(%arg0: i32) -> (i32, i32, i32) {
    %c0_i32 = arith.constant 0 : i32
    %c0_i32_0 = arith.constant 0 : i32
    %c0_i32_1 = arith.constant 0 : i32
    return %arg0, %c0_i32, %c0_i32_0 : i32, i32, i32
  }
}

</mosaic_0001>

<llo_original>
// kernel: tpu_custom_call.1
$region0: #{tpu_custom_call.1}
  #allocation0 [shape = 'u32[]', space=smem, size = 0x4, offset = 0x4, fixed_abs, tag = 'smem constant byte address 0x4 - core index']
  #allocation1 [shape = 'u32[144,128]{1,0:T(1,128)}', space=vmem, size = 0x12000, scoped, tag = 'internal scratch']
  #allocation2 [shape = 'f32[16,64]{1,0:T(8,128)}', space=vmem, size = 0x2000, scoped, tag = 'scratch operand']
  #allocation3 [shape = 'f32[16,64]{1,0:T(8,128)}', space=vmem, size = 0x2000, scoped, tag = 'scratch operand']
  #allocation4 [shape = 'f32[16,64]{1,0:T(8,128)}', space=vmem, size = 0x2000, scoped, tag = 'scratch operand']
  #allocation5 [shape = 'f32[1,64]{1,0:T(1,128)}', space=vmem, size = 0x200, scoped, tag = 'scratch operand']
  #allocation6 [shape = 'f32[16,64]{1,0:T(8,128)}', space=vmem, size = 0x2000, scoped, tag = 'scratch operand']
  %s0 = inlined_call_operand.hbm [shape: f32[2,16,32], index: 0, kind: input, shape index: {}]
  %s1 = inlined_call_operand.hbm [shape: f32[16,16], index: 1, kind: input, shape index: {}]
  %s2 = inlined_call_operand.vmem [shape: f32[3,32,32], index: 2, kind: input, shape index: {}]
  %s3 = inlined_call_operand.hbm [shape: f32[32,32], index: 3, kind: input, shape index: {}]
  %s4 = inlined_call_operand.vmem [shape: f32[2,1,32], index: 4, kind: input, shape index: {}]
  %s5 = inlined_call_operand.hbm [shape: f32[3,32,64], index: 5, kind: input, shape index: {}]
  %s6 = inlined_call_operand.hbm [shape: f32[3,64,64], index: 6, kind: input, shape index: {}]
  %s7 = inlined_call_operand.vmem [shape: f32[4,1,64], index: 7, kind: input, shape index: {}]
  %s8 = inlined_call_operand.vmem [shape: f32[64,32], index: 8, kind: input, shape index: {}]
  %s9 = inlined_call_operand.vmem [shape: f32[1,32], index: 9, kind: input, shape index: {}]
  %s10 = inlined_call_operand.vmem [shape: f32[2,1,32], index: 10, kind: input, shape index: {}]
  %s11 = inlined_call_operand.hbm [shape: f32[2,16,32], index: 11, kind: output, shape index: {}]
  %s12 = sld [smem:[#allocation0]]
  $region104: #{tpu_custom_call.1} parent=0
    _
  %s14 = ssub.s32 1, %s12
  %s15 = scalar_select 0, %s14, %s12
  $region1: #{tpu_custom_call.1} parent=0
    #allocation7 [shape = 'u8[16384]{0}', space=vmem, size = 0x4000, scoped, tag = 'input window, operand 0']
    #allocation8 [shape = 's32[2]{0}', space=sflag, size = 0x8, scoped, tag = 'scoped memory for tpu_custom_call.1']
    #allocation9 [shape = 's32[2]{0}', space=sflag, size = 0x8, scoped, tag = 'scoped memory for tpu_custom_call.1']
    #allocation10 [shape = 'u8[8192]{0}', space=vmem, size = 0x2000, scoped, tag = 'input window, operand 1, single buffered']
    #allocation11 [shape = 's32[1]{0}', space=sflag, size = 0x4, scoped, tag = 'scoped memory for tpu_custom_call.1']
    #allocation12 [shape = 'u8[16384]{0}', space=vmem, size = 0x4000, scoped, tag = 'input window, operand 3, single buffered']
    #allocation13 [shape = 'u8[49152]{0}', space=vmem, size = 0xc000, scoped, tag = 'input window, operand 5, single buffered']
    #allocation14 [shape = 's32[1]{0}', space=sflag, size = 0x4, scoped, tag = 'scoped memory for tpu_custom_call.1']
    #allocation15 [shape = 'u8[98304]{0}', space=vmem, size = 0x18000, scoped, tag = 'input window, operand 6, single buffered']
    #allocation16 [shape = 'u8[16384]{0}', space=vmem, size = 0x4000, scoped, tag = 'output window, operand 0']
    %16 = vsyncpa [#allocation8], 0
    %s17 = scalar_lea.sflag [#allocation8], 1
    %18 = vsyncpa %s17, 0
    %19 = vsyncpa [#allocation11], 0
    %20 = vsyncpa [#allocation14], 0
    %21 = vsyncpa [#allocation9], 0
    %s22 = scalar_lea.sflag [#allocation9], 1
    %23 = vsyncpa %s22, 0
    loop: start=0, step=1, limit=4
    $region2: #{tpu_custom_call.1} parent=1 // loop_pre_header
      _
    $region3: #{tpu_custom_call.1} parent=1 // loop_header
      %s25 = sphi 0, %s29
      %p26 = scmp.ge.s32.totalorder %s25, 4
      %s35 = sphi 0, %s37
      %s38 = sphi 0, %s35
      %s39 = sphi 0, %s38
      %s55 = sphi 0, %s39
      %s59 = sphi 0, %s59
      %s61 = sphi 0, %s59
      %s62 = sphi 0, %s61
      %s76 = sphi 0, %s62
      %s80 = sphi 0, %s80
      %s82 = sphi 0, %s80
      %s83 = sphi 0, %s82
      %s97 = sphi 0, %s83
      %s101 = sphi 0, %s101
      %s103 = sphi 0, %s101
      %s104 = sphi 0, %s103
      %s118 = sphi 0, %s104
      %s122 = sphi 0, %s122
      %s124 = sphi 0, %s122
      %s125 = sphi 0, %s124
      %s139 = sphi 0, %s125
      %s143 = sphi 0, %s143
      %s145 = sphi 0, %s143
      %s146 = sphi 0, %s145
      %s160 = sphi 0, %s146
      %s164 = sphi 0, %s164
      %s166 = sphi 0, %s164
      %s167 = sphi 0, %s166
      %s181 = sphi 0, %s167
      %s185 = sphi 0, %s185
      %s187 = sphi 0, %s185
      %s188 = sphi 0, %s187
      %s202 = sphi 0, %s188
      %s206 = sphi 0, %s206
      %s208 = sphi 0, %s206
      %s209 = sphi 0, %s208
      %s223 = sphi 0, %s209
      %s227 = sphi 0, %s227
      %s229 = sphi 0, %s227
      %s230 = sphi 0, %s229
      %s244 = sphi 0, %s230
      %s248 = sphi 0, %s248
      %s250 = sphi 0, %s248
      %s251 = sphi 0, %s250
      %s265 = sphi 0, %s251
      %s271 = sphi 0, %s273
      %s274 = sphi 0, %s271
      %s275 = sphi 0, %s274
      %s291 = sphi 0, %s275
    $region4: #{tpu_custom_call.1} parent=1 // loop_header_branch
      %28 = sbr.rel (%p26) target = $region8
    $region5: #{tpu_custom_call.1} parent=1 // loop_body
      %s30 = ssub.s32 %s25, 1
      %s31 = ssub.s32 %s25, 2
      %s32 = sadd.s32 %s25, 1
      %s33 = ssub.s32 %s25, %s32
      %p34 = scmp.eq.s32.totalorder %s33, 0
      %s36 = sadd.s32 %s35, 1
      %s37 = scalar_select %p34, %s35, %s36
      %p40 = pneg %p34
      %p41 = scmp.eq.s32.totalorder %s25, 1
      %p42 = por %p40, %p41
      %p43 = scmp.ne.s32.totalorder %s35, %s38
      %p44 = scmp.eq.s32.totalorder %s25, 0
      %p45 = por %p43, %p44
      %p46 = scmp.ne.s32.totalorder %s35, %s38
      %p47 = scmp.eq.s32.totalorder %s30, 1
      %p48 = por %p46, %p47
      %p49 = scmp.ne.s32.totalorder %s38, %s39
      %p50 = scmp.eq.s32.totalorder %s30, 0
      %p51 = por %p49, %p50
      %p52 = scmp.ne.s32.totalorder %s38, %s39
      %p53 = scmp.eq.s32.totalorder %s31, 1
      %p54 = por %p52, %p53
      %p56 = scmp.ne.s32.totalorder %s39, %s55
      %p57 = scmp.eq.s32.totalorder %s31, 0
      %p58 = por %p56, %p57
      %s60 = sadd.s32 %s59, 1
      %p63 = scmp.eq.s32.totalorder %s25, 1
      %p64 = scmp.ne.s32.totalorder %s59, %s61
      %p65 = scmp.eq.s32.totalorder %s25, 0
      %p66 = por %p64, %p65
      %p67 = scmp.ne.s32.totalorder %s59, %s61
      %p68 = scmp.eq.s32.totalorder %s30, 1
      %p69 = por %p67, %p68
      %p70 = scmp.ne.s32.totalorder %s61, %s62
      %p71 = scmp.eq.s32.totalorder %s30, 0
      %p72 = por %p70, %p71
      %p73 = scmp.ne.s32.totalorder %s61, %s62
      %p74 = scmp.eq.s32.totalorder %s31, 1
      %p75 = por %p73, %p74
      %p77 = scmp.ne.s32.totalorder %s62, %s76
      %p78 = scmp.eq.s32.totalorder %s31, 0
      %p79 = por %p77, %p78
      %s81 = sadd.s32 %s80, 1
      %p84 = scmp.eq.s32.totalorder %s25, 1
      %p85 = scmp.ne.s32.totalorder %s80, %s82
      %p86 = scmp.eq.s32.totalorder %s25, 0
      %p87 = por %p85, %p86
      %p88 = scmp.ne.s32.totalorder %s80, %s82
      %p89 = scmp.eq.s32.totalorder %s30, 1
      %p90 = por %p88, %p89
      %p91 = scmp.ne.s32.totalorder %s82, %s83
      %p92 = scmp.eq.s32.totalorder %s30, 0
      %p93 = por %p91, %p92
      %p94 = scmp.ne.s32.totalorder %s82, %s83
      %p95 = scmp.eq.s32.totalorder %s31, 1
      %p96 = por %p94, %p95
      %p98 = scmp.ne.s32.totalorder %s83, %s97
      %p99 = scmp.eq.s32.totalorder %s31, 0
      %p100 = por %p98, %p99
      %s102 = sadd.s32 %s101, 1
      %p105 = scmp.eq.s32.totalorder %s25, 1
      %p106 = scmp.ne.s32.totalorder %s101, %s103
      %p107 = scmp.eq.s32.totalorder %s25, 0
      %p108 = por %p106, %p107
      %p109 = scmp.ne.s32.totalorder %s101, %s103
      %p110 = scmp.eq.s32.totalorder %s30, 1
      %p111 = por %p109, %p110
      %p112 = scmp.ne.s32.totalorder %s103, %s104
      %p113 = scmp.eq.s32.totalorder %s30, 0
      %p114 = por %p112, %p113
      %p115 = scmp.ne.s32.totalorder %s103, %s104
      %p116 = scmp.eq.s32.totalorder %s31, 1
      %p117 = por %p115, %p116
      %p119 = scmp.ne.s32.totalorder %s104, %s118
      %p120 = scmp.eq.s32.totalorder %s31, 0
      %p121 = por %p119, %p120
      %s123 = sadd.s32 %s122, 1
      %p126 = scmp.eq.s32.totalorder %s25, 1
      %p127 = scmp.ne.s32.totalorder %s122, %s124
      %p128 = scmp.eq.s32.totalorder %s25, 0
      %p129 = por %p127, %p128
      %p130 = scmp.ne.s32.totalorder %s122, %s124
      %p131 = scmp.eq.s32.totalorder %s30, 1
      %p132 = por %p130, %p131
      %p133 = scmp.ne.s32.totalorder %s124, %s125
      %p134 = scmp.eq.s32.totalorder %s30, 0
      %p135 = por %p133, %p134
      %p136 = scmp.ne.s32.totalorder %s124, %s125
      %p137 = scmp.eq.s32.totalorder %s31, 1
      %p138 = por %p136, %p137
      %p140 = scmp.ne.s32.totalorder %s125, %s139
      %p141 = scmp.eq.s32.totalorder %s31, 0
      %p142 = por %p140, %p141
      %s144 = sadd.s32 %s143, 1
      %p147 = scmp.eq.s32.totalorder %s25, 1
      %p148 = scmp.ne.s32.totalorder %s143, %s145
      %p149 = scmp.eq.s32.totalorder %s25, 0
      %p150 = por %p148, %p149
      %p151 = scmp.ne.s32.totalorder %s143, %s145
      %p152 = scmp.eq.s32.totalorder %s30, 1
      %p153 = por %p151, %p152
      %p154 = scmp.ne.s32.totalorder %s145, %s146
      %p155 = scmp.eq.s32.totalorder %s30, 0
      %p156 = por %p154, %p155
      %p157 = scmp.ne.s32.totalorder %s145, %s146
      %p158 = scmp.eq.s32.totalorder %s31, 1
      %p159 = por %p157, %p158
      %p161 = scmp.ne.s32.totalorder %s146, %s160
      %p162 = scmp.eq.s32.totalorder %s31, 0
      %p163 = por %p161, %p162
      %s165 = sadd.s32 %s164, 1
      %p168 = scmp.eq.s32.totalorder %s25, 1
      %p169 = scmp.ne.s32.totalorder %s164, %s166
      %p170 = scmp.eq.s32.totalorder %s25, 0
      %p171 = por %p169, %p170
      %p172 = scmp.ne.s32.totalorder %s164, %s166
      %p173 = scmp.eq.s32.totalorder %s30, 1
      %p174 = por %p172, %p173
      %p175 = scmp.ne.s32.totalorder %s166, %s167
      %p176 = scmp.eq.s32.totalorder %s30, 0
      %p177 = por %p175, %p176
      %p178 = scmp.ne.s32.totalorder %s166, %s167
      %p179 = scmp.eq.s32.totalorder %s31, 1
      %p180 = por %p178, %p179
      %p182 = scmp.ne.s32.totalorder %s167, %s181
      %p183 = scmp.eq.s32.totalorder %s31, 0
      %p184 = por %p182, %p183
      %s186 = sadd.s32 %s185, 1
      %p189 = scmp.eq.s32.totalorder %s25, 1
      %p190 = scmp.ne.s32.totalorder %s185, %s187
      %p191 = scmp.eq.s32.totalorder %s25, 0
      %p192 = por %p190, %p191
      %p193 = scmp.ne.s32.totalorder %s185, %s187
      %p194 = scmp.eq.s32.totalorder %s30, 1
      %p195 = por %p193, %p194
      %p196 = scmp.ne.s32.totalorder %s187, %s188
      %p197 = scmp.eq.s32.totalorder %s30, 0
      %p198 = por %p196, %p197
      %p199 = scmp.ne.s32.totalorder %s187, %s188
      %p200 = scmp.eq.s32.totalorder %s31, 1
      %p201 = por %p199, %p200
      %p203 = scmp.ne.s32.totalorder %s188, %s202
      %p204 = scmp.eq.s32.totalorder %s31, 0
      %p205 = por %p203, %p204
      %s207 = sadd.s32 %s206, 1
      %p210 = scmp.eq.s32.totalorder %s25, 1
      %p211 = scmp.ne.s32.totalorder %s206, %s208
      %p212 = scmp.eq.s32.totalorder %s25, 0
      %p213 = por %p211, %p212
      %p214 = scmp.ne.s32.totalorder %s206, %s208
      %p215 = scmp.eq.s32.totalorder %s30, 1
      %p216 = por %p214, %p215
      %p217 = scmp.ne.s32.totalorder %s208, %s209
      %p218 = scmp.eq.s32.totalorder %s30, 0
      %p219 = por %p217, %p218
      %p220 = scmp.ne.s32.totalorder %s208, %s209
      %p221 = scmp.eq.s32.totalorder %s31, 1
      %p222 = por %p220, %p221
      %p224 = scmp.ne.s32.totalorder %s209, %s223
      %p225 = scmp.eq.s32.totalorder %s31, 0
      %p226 = por %p224, %p225
      %s228 = sadd.s32 %s227, 1
      %p231 = scmp.eq.s32.totalorder %s25, 1
      %p232 = scmp.ne.s32.totalorder %s227, %s229
      %p233 = scmp.eq.s32.totalorder %s25, 0
      %p234 = por %p232, %p233
      %p235 = scmp.ne.s32.totalorder %s227, %s229
      %p236 = scmp.eq.s32.totalorder %s30, 1
      %p237 = por %p235, %p236
      %p238 = scmp.ne.s32.totalorder %s229, %s230
      %p239 = scmp.eq.s32.totalorder %s30, 0
      %p240 = por %p238, %p239
      %p241 = scmp.ne.s32.totalorder %s229, %s230
      %p242 = scmp.eq.s32.totalorder %s31, 1
      %p243 = por %p241, %p242
      %p245 = scmp.ne.s32.totalorder %s230, %s244
      %p246 = scmp.eq.s32.totalorder %s31, 0
      %p247 = por %p245, %p246
      %s249 = sadd.s32 %s248, 1
      %p252 = scmp.eq.s32.totalorder %s25, 1
      %p253 = scmp.ne.s32.totalorder %s248, %s250
      %p254 = scmp.eq.s32.totalorder %s25, 0
      %p255 = por %p253, %p254
      %p256 = scmp.ne.s32.totalorder %s248, %s250
      %p257 = scmp.eq.s32.totalorder %s30, 1
      %p258 = por %p256, %p257
      %p259 = scmp.ne.s32.totalorder %s250, %s251
      %p260 = scmp.eq.s32.totalorder %s30, 0
      %p261 = por %p259, %p260
      %p262 = scmp.ne.s32.totalorder %s250, %s251
      %p263 = scmp.eq.s32.totalorder %s31, 1
      %p264 = por %p262, %p263
      %p266 = scmp.ne.s32.totalorder %s251, %s265
      %p267 = scmp.eq.s32.totalorder %s31, 0
      %p268 = por %p266, %p267
      %s269 = ssub.s32 %s25, %s32
      %p270 = scmp.eq.s32.totalorder %s269, 0
      %s272 = sadd.s32 %s271, 1
      %s273 = scalar_select %p270, %s271, %s272
      %p276 = pneg %p270
      %p277 = scmp.eq.s32.totalorder %s25, 1
      %p278 = por %p276, %p277
      %p279 = scmp.ne.s32.totalorder %s271, %s274
      %p280 = scmp.eq.s32.totalorder %s25, 0
      %p281 = por %p279, %p280
      %p282 = scmp.ne.s32.totalorder %s271, %s274
      %p283 = scmp.eq.s32.totalorder %s30, 1
      %p284 = por %p282, %p283
      %p285 = scmp.ne.s32.totalorder %s274, %s275
      %p286 = scmp.eq.s32.totalorder %s30, 0
      %p287 = por %p285, %p286
      %p288 = scmp.ne.s32.totalorder %s274, %s275
      %p289 = scmp.eq.s32.totalorder %s31, 1
      %p290 = por %p288, %p289
      %p292 = scmp.ne.s32.totalorder %s275, %s291
      %p293 = scmp.eq.s32.totalorder %s31, 0
      %p294 = por %p292, %p293
      %p295 = scmp.le.s32.totalorder 1, %s25
      %p296 = scmp.lt.s32.totalorder %s25, 3
      %p297 = pnand %p295, %p296
      %p298 = pneg %p297
      // Predicated region
      $region9: #{tpu_custom_call.1} parent=5 // pred_check
        _
      $region10: #{tpu_custom_call.1} parent=5 // pred_check_branch
        %300 = sbr.rel (%p297) target = $region12
      $region11: #{tpu_custom_call.1} parent=5 // pred_region
        %s301 = ssub.s32 %s25, 1
        // Predicated region
        $region13: #{tpu_custom_call.1} parent=11 // pred_check
          %p302 = pneg %p72
        $region14: #{tpu_custom_call.1} parent=11 // pred_check_branch
          %304 = sbr.rel (%p302) target = $region16
        $region15: #{tpu_custom_call.1} parent=11 // pred_region
          %s306 = ssub.s32 256, 256
          %307 = vsyncadd [#allocation11], %s306
          %s308 = sshll.u32 [#allocation10], 4
          %s309 = int_to_ptr.vmem [resolvable:$true] %s308
          %314 = dma.hbm_to_vmem [thread:$0]  %s1, 256, %s309, [#allocation11], 128, 128, 8
        $region16: #{tpu_custom_call.1} parent=11 // pred_fallthru
          _
        // Predicated region
        $region17: #{tpu_custom_call.1} parent=11 // pred_check
          %p315 = pneg %p93
        $region18: #{tpu_custom_call.1} parent=11 // pred_check_branch
          %317 = sbr.rel (%p315) target = $region20
        $region19: #{tpu_custom_call.1} parent=11 // pred_region
          _
        $region20: #{tpu_custom_call.1} parent=11 // pred_fallthru
          _
        // Predicated region
        $region21: #{tpu_custom_call.1} parent=11 // pred_check
          %p318 = pneg %p114
        $region22: #{tpu_custom_call.1} parent=11 // pred_check_branch
          %320 = sbr.rel (%p318) target = $region24
        $region23: #{tpu_custom_call.1} parent=11 // pred_region
          %s322 = ssub.s32 512, 512
          %323 = vsyncadd [#allocation11], %s322
          %s324 = sshll.u32 [#allocation12], 4
          %s325 = int_to_ptr.vmem [resolvable:$true] %s324
          %330 = dma.hbm_to_vmem [thread:$0]  %s3, 512, %s325, [#allocation11], 128, 128, 8
        $region24: #{tpu_custom_call.1} parent=11 // pred_fallthru
          _
        // Predicated region
        $region25: #{tpu_custom_call.1} parent=11 // pred_check
          %p331 = pneg %p135
        $region26: #{tpu_custom_call.1} parent=11 // pred_check_branch
          %333 = sbr.rel (%p331) target = $region28
        $region27: #{tpu_custom_call.1} parent=11 // pred_region
          _
        $region28: #{tpu_custom_call.1} parent=11 // pred_fallthru
          _
        // Predicated region
        $region29: #{tpu_custom_call.1} parent=11 // pred_check
          %p334 = pneg %p156
        $region30: #{tpu_custom_call.1} parent=11 // pred_check_branch
          %336 = sbr.rel (%p334) target = $region32
        $region31: #{tpu_custom_call.1} parent=11 // pred_region
          %s338 = ssub.s32 1536, 1536
          %339 = vsyncadd [#allocation14], %s338
          %s340 = sshll.u32 [#allocation13], 4
          %s341 = int_to_ptr.vmem [resolvable:$true] %s340
          %346 = dma.hbm_to_vmem [thread:$0]  %s5, 1536, %s341, [#allocation14], 128, 128, 8
        $region32: #{tpu_custom_call.1} parent=11 // pred_fallthru
          _
        // Predicated region
        $region33: #{tpu_custom_call.1} parent=11 // pred_check
          %p347 = pneg %p177
        $region34: #{tpu_custom_call.1} parent=11 // pred_check_branch
          %349 = sbr.rel (%p347) target = $region36
        $region35: #{tpu_custom_call.1} parent=11 // pred_region
          %s351 = ssub.s32 3072, 3072
          %352 = vsyncadd [#allocation14], %s351
          %s353 = sshll.u32 [#allocation15], 4
          %s354 = int_to_ptr.vmem [resolvable:$true] %s353
          %359 = dma.hbm_to_vmem [thread:$0]  %s6, 3072, %s354, [#allocation14], 128, 128, 8
        $region36: #{tpu_custom_call.1} parent=11 // pred_fallthru
          _
        // Predicated region
        $region37: #{tpu_custom_call.1} parent=11 // pred_check
          %p360 = pneg %p198
        $region38: #{tpu_custom_call.1} parent=11 // pred_check_branch
          %362 = sbr.rel (%p360) target = $region40
        $region39: #{tpu_custom_call.1} parent=11 // pred_region
          _
        $region40: #{tpu_custom_call.1} parent=11 // pred_fallthru
          _
        // Predicated region
        $region41: #{tpu_custom_call.1} parent=11 // pred_check
          %p363 = pneg %p219
        $region42: #{tpu_custom_call.1} parent=11 // pred_check_branch
          %365 = sbr.rel (%p363) target = $region44
        $region43: #{tpu_custom_call.1} parent=11 // pred_region
          _
        $region44: #{tpu_custom_call.1} parent=11 // pred_fallthru
          _
        // Predicated region
        $region45: #{tpu_custom_call.1} parent=11 // pred_check
          %p366 = pneg %p240
        $region46: #{tpu_custom_call.1} parent=11 // pred_check_branch
          %368 = sbr.rel (%p366) target = $region48
        $region47: #{tpu_custom_call.1} parent=11 // pred_region
          _
        $region48: #{tpu_custom_call.1} parent=11 // pred_fallthru
          _
        // Predicated region
        $region49: #{tpu_custom_call.1} parent=11 // pred_check
          %p369 = pneg %p261
        $region50: #{tpu_custom_call.1} parent=11 // pred_check_branch
          %371 = sbr.rel (%p369) target = $region52
        $region51: #{tpu_custom_call.1} parent=11 // pred_region
          _
        $region52: #{tpu_custom_call.1} parent=11 // pred_fallthru
          _
      $region12: #{tpu_custom_call.1} parent=5 // pred_fallthru
        _
      %p372 = scmp.lt.s32.totalorder %s25, 2
      // Predicated region
      $region53: #{tpu_custom_call.1} parent=5 // pred_check
        %p373 = pneg %p372
      $region54: #{tpu_custom_call.1} parent=5 // pred_check_branch
        %375 = sbr.rel (%p373) target = $region56
      $region55: #{tpu_custom_call.1} parent=5 // pred_region
        // Predicated region
        $region57: #{tpu_custom_call.1} parent=55 // pred_check
          %p376 = pneg %p45
        $region58: #{tpu_custom_call.1} parent=55 // pred_check_branch
          %378 = sbr.rel (%p376) target = $region60
        $region59: #{tpu_custom_call.1} parent=55 // pred_region
          %s379 = sand.u32 %s35, 1
          %s380 = scalar_lea.sflag [#allocation8], %s379
          %s381 = sand.u32 %s35, 1
          %s382 = smul.addr %s381, 16
          %s383 = scalar_lea.vmem [#allocation7], %s382
          %s385 = ssub.s32 256, 256
          %386 = vsyncadd %s380, %s385
          %s387 = smul.addr %s25, 2
          %s388 = smul.addr %s387, 128
          %s389 = scalar_lea.hbm %s0, %s388
          %s390 = sshll.u32 %s383, 4
          %s391 = int_to_ptr.vmem [resolvable:$true] %s390
          %396 = dma.hbm_to_vmem [thread:$0]  %s389, 256, %s391, %s380, 128, 128, 8
        $region60: #{tpu_custom_call.1} parent=55 // pred_fallthru
          _
      $region56: #{tpu_custom_call.1} parent=5 // pred_fallthru
        _
      %p397 = scmp.le.s32.totalorder 1, %s25
      %p398 = scmp.lt.s32.totalorder %s25, 3
      %p399 = pnand %p397, %p398
      %p400 = pneg %p399
      // Predicated region
      $region61: #{tpu_custom_call.1} parent=5 // pred_check
        _
      $region62: #{tpu_custom_call.1} parent=5 // pred_check_branch
        %402 = sbr.rel (%p399) target = $region64
      $region63: #{tpu_custom_call.1} parent=5 // pred_region
        %s403 = ssub.s32 %s25, 1
        %s404 = sand.u32 %s38, 1
        %s405 = scalar_lea.sflag [#allocation8], %s404
        %s406 = sand.u32 %s38, 1
        %s407 = smul.addr %s406, 16
        %s408 = scalar_lea.vmem [#allocation7], %s407
        // Predicated region
        $region65: #{tpu_custom_call.1} parent=63 // pred_check
          %p409 = pneg %p51
        $region66: #{tpu_custom_call.1} parent=63 // pred_check_branch
          %411 = sbr.rel (%p409) target = $region68
        $region67: #{tpu_custom_call.1} parent=63 // pred_region
          %412 = dma.done %s405, 256
        $region68: #{tpu_custom_call.1} parent=63 // pred_fallthru
          _
        // Predicated region
        $region69: #{tpu_custom_call.1} parent=63 // pred_check
          %p413 = pneg %p72
        $region70: #{tpu_custom_call.1} parent=63 // pred_check_branch
          %415 = sbr.rel (%p413) target = $region72
        $region71: #{tpu_custom_call.1} parent=63 // pred_region
          %416 = dma.done [#allocation11], 256
        $region72: #{tpu_custom_call.1} parent=63 // pred_fallthru
          _
        // Predicated region
        $region73: #{tpu_custom_call.1} parent=63 // pred_check
          %p417 = pneg %p114
        $region74: #{tpu_custom_call.1} parent=63 // pred_check_branch
          %419 = sbr.rel (%p417) target = $region76
        $region75: #{tpu_custom_call.1} parent=63 // pred_region
          %420 = dma.done [#allocation11], 512
        $region76: #{tpu_custom_call.1} parent=63 // pred_fallthru
          _
        // Predicated region
        $region77: #{tpu_custom_call.1} parent=63 // pred_check
          %p421 = pneg %p156
        $region78: #{tpu_custom_call.1} parent=63 // pred_check_branch
          %423 = sbr.rel (%p421) target = $region80
        $region79: #{tpu_custom_call.1} parent=63 // pred_region
          %424 = dma.done [#allocation14], 1536
        $region80: #{tpu_custom_call.1} parent=63 // pred_fallthru
          _
        // Predicated region
        $region81: #{tpu_custom_call.1} parent=63 // pred_check
          %p425 = pneg %p177
        $region82: #{tpu_custom_call.1} parent=63 // pred_check_branch
          %427 = sbr.rel (%p425) target = $region84
        $region83: #{tpu_custom_call.1} parent=63 // pred_region
          %428 = dma.done [#allocation14], 3072
        $region84: #{tpu_custom_call.1} parent=63 // pred_fallthru
          _
        %s429 = sand.u32 %s38, 1
        %s430 = scalar_lea.sflag [#allocation8], %s429
        %s431 = sand.u32 %s38, 1
        %s432 = smul.addr %s431, 16
        %s433 = scalar_lea.vmem [#allocation7], %s432
        %p434 = pneg %p51
        %p435 = pneg %p48
        %p436 = pneg %p72
        %p437 = pneg %p69
        %p438 = pneg %p93
        %p439 = pneg %p90
        %p440 = pneg %p114
        %p441 = pneg %p111
        %p442 = pneg %p135
        %p443 = pneg %p132
        %p444 = pneg %p156
        %p445 = pneg %p153
        %p446 = pneg %p177
        %p447 = pneg %p174
        %p448 = pneg %p198
        %p449 = pneg %p195
        %p450 = pneg %p219
        %p451 = pneg %p216
        %p452 = pneg %p240
        %p453 = pneg %p237
        %p454 = pneg %p261
        %p455 = pneg %p258
        %p456 = pneg %p287
        %p457 = pneg %p284
        %s458 = sand.u32 %s274, 1
        %s459 = scalar_lea.sflag [#allocation9], %s458
        %s460 = sand.u32 %s274, 1
        %s461 = smul.addr %s460, 16
        %s462 = scalar_lea.vmem [#allocation16], %s461
        %v463 = vld [vmem:[%s408] sm:$0xff]
        %v464 = vld [vmem:[%s408 + $0x8] sm:$0xff]
        %v465 = vld [vmem:[#allocation10] sm:$0xff]
        %v466 = vld [vmem:[#allocation10 + $0x8] sm:$0xff]
        %v467 = vld [vmem:[%s2] sm:$0xff]
        %v468 = vld [vmem:[%s2 + $0x8] sm:$0xff]
        %v469 = vld [vmem:[%s2 + $0x10] sm:$0xff]
        %v470 = vld [vmem:[%s2 + $0x18] sm:$0xff]
        %vm471 = vcmask 261120
        %v473 = vsel %vm471, %v463, 0
        %v476 = vsel %vm471, %v464, 0
        %478 = vmatprep.subr.mxu0 0.0
        %479 = vmatpush1.msra.mxu0 %v467
        %480 = vmatprep.subr.mxu0 0.0
        %481 = vmatpush1.msra.mxu0 %v468
        %482 = vmatprep.subr.mxu0 0.0
        %483 = vmatpush1.msra.mxu0 %v469
        %484 = vmatprep.subr.mxu0 0.0
        %485 = vmatpush1.msra.mxu0 %v470
        %486 = vmatprep.subr.mxu0 0.0
        %487 = vmatpush1.msra.mxu0 0.0
        %488 = vmatprep.subr.mxu0 0.0
        %489 = vmatpush1.msra.mxu0 0.0
        %490 = vmatprep.subr.mxu0 0.0
        %491 = vmatpush1.msra.mxu0 0.0
        %492 = vmatprep.subr.mxu0 0.0
        %493 = vmatpush1.msra.mxu0 0.0
        %494 = vmatprep.subr.mxu0 0.0
        %495 = vmatpush1.msra.mxu0 0.0
        %496 = vmatprep.subr.mxu0 0.0
        %497 = vmatpush1.msra.mxu0 0.0
        %498 = vmatprep.subr.mxu0 0.0
        %499 = vmatpush1.msra.mxu0 0.0
        %500 = vmatprep.subr.mxu0 0.0
        %501 = vmatpush1.msra.mxu0 0.0
        %502 = vmatprep.subr.mxu0 0.0
        %503 = vmatpush1.msra.mxu0 0.0
        %504 = vmatprep.subr.mxu0 0.0
        %505 = vmatpush1.msra.mxu0 0.0
        %506 = vmatprep.subr.mxu0 0.0
        %507 = vmatpush1.msra.mxu0 0.0
        %508 = vmatprep.subr.mxu0 0.0
        %509 = vmatpush1.msra.mxu0 0.0
        %510 = vmatprep.subr.mxu0 0.0
        %511 = vmatpush1.msra.mxu0 0.0
        %512 = vmatprep.subr.mxu0 0.0
        %513 = vmatpush1.msra.mxu0 0.0
        %514 = vmatprep.subr.mxu0 0.0
        %515 = vmatpush1.msra.mxu0 0.0
        %516 = vmatprep.subr.mxu0 0.0
        %517 = vmatpush1.msra.mxu0 0.0
        %518 = vmatprep.subr.mxu0 0.0
        %519 = vmatpush1.msra.mxu0 0.0
        %520 = vmatprep.subr.mxu0 0.0
        %521 = vmatpush1.msra.mxu0 0.0
        %522 = vmatprep.subr.mxu0 0.0
        %523 = vmatpush1.msra.mxu0 0.0
        %524 = vmatprep.subr.mxu0 0.0
        %525 = vmatpush1.msra.mxu0 0.0
        %526 = vmatprep.subr.mxu0 0.0
        %527 = vmatpush1.msra.mxu0 0.0
        %528 = vmatprep.subr.mxu0 0.0
        %529 = vmatpush1.msra.mxu0 0.0
        %530 = vmatprep.subr.mxu0 0.0
        %531 = vmatpush1.msra.mxu0 0.0
        %532 = vmatprep.subr.mxu0 0.0
        %533 = vmatpush1.msra.mxu0 0.0
        %534 = vmatprep.subr.mxu0 0.0
        %535 = vmatpush1.msra.mxu0 0.0
        %536 = vmatprep.subr.mxu0 0.0
        %537 = vmatpush1.msra.mxu0 0.0
        %538 = vmatprep.subr.mxu0 0.0
        %539 = vmatpush1.msra.mxu0 0.0
        %540 = vmatprep.subr.mxu0 0.0
        %541 = vmatpush1.msra.mxu0 0.0
        %542 = vmatprep.mubr.f32.mxu0 0.0
        %543 = vmatmul.mubr.f32.gmra.mrb[0].mxu0 %v473
        %v544 = vpop.f32.mrb[0].mxu0
        %v545 = vadd.f32 0.0, %v544
        %v546 = vpop.f32.mrb[0].mxu0
        %547 = vmatprep.mubr.f32.mxu0 0.0
        %548 = vmatmul.mubr.f32.gmra.mrb[0].mxu0 %v476
        %v549 = vpop.f32.mrb[0].mxu0
        %v550 = vadd.f32 0.0, %v549
        %v551 = vpop.f32.mrb[0].mxu0
        %552 = vdwg.mxu0
        %s553 = scalar_lea.vmem %s2, 32
        %v554 = vld [vmem:[%s553] sm:$0xff]
        %v555 = vld [vmem:[%s553 + $0x8] sm:$0xff]
        %v556 = vld [vmem:[%s553 + $0x10] sm:$0xff]
        %v557 = vld [vmem:[%s553 + $0x18] sm:$0xff]
        %558 = vmatprep.subr.mxu0 0.0
        %559 = vmatpush1.msra.mxu0 %v554
        %560 = vmatprep.subr.mxu0 0.0
        %561 = vmatpush1.msra.mxu0 %v555
        %562 = vmatprep.subr.mxu0 0.0
        %563 = vmatpush1.msra.mxu0 %v556
        %564 = vmatprep.subr.mxu0 0.0
        %565 = vmatpush1.msra.mxu0 %v557
        %566 = vmatprep.subr.mxu0 0.0
        %567 = vmatpush1.msra.mxu0 0.0
        %568 = vmatprep.subr.mxu0 0.0
        %569 = vmatpush1.msra.mxu0 0.0
        %570 = vmatprep.subr.mxu0 0.0
        %571 = vmatpush1.msra.mxu0 0.0
        %572 = vmatprep.subr.mxu0 0.0
        %573 = vmatpush1.msra.mxu0 0.0
        %574 = vmatprep.subr.mxu0 0.0
        %575 = vmatpush1.msra.mxu0 0.0
        %576 = vmatprep.subr.mxu0 0.0
        %577 = vmatpush1.msra.mxu0 0.0
        %578 = vmatprep.subr.mxu0 0.0
        %579 = vmatpush1.msra.mxu0 0.0
        %580 = vmatprep.subr.mxu0 0.0
        %581 = vmatpush1.msra.mxu0 0.0
        %582 = vmatprep.subr.mxu0 0.0
        %583 = vmatpush1.msra.mxu0 0.0
        %584 = vmatprep.subr.mxu0 0.0
        %585 = vmatpush1.msra.mxu0 0.0
        %586 = vmatprep.subr.mxu0 0.0
        %587 = vmatpush1.msra.mxu0 0.0
        %588 = vmatprep.subr.mxu0 0.0
        %589 = vmatpush1.msra.mxu0 0.0
        %590 = vmatprep.subr.mxu0 0.0
        %591 = vmatpush1.msra.mxu0 0.0
        %592 = vmatprep.subr.mxu0 0.0
        %593 = vmatpush1.msra.mxu0 0.0
        %594 = vmatprep.subr.mxu0 0.0
        %595 = vmatpush1.msra.mxu0 0.0
        %596 = vmatprep.subr.mxu0 0.0
        %597 = vmatpush1.msra.mxu0 0.0
        %598 = vmatprep.subr.mxu0 0.0
        %599 = vmatpush1.msra.mxu0 0.0
        %600 = vmatprep.subr.mxu0 0.0
        %601 = vmatpush1.msra.mxu0 0.0
        %602 = vmatprep.subr.mxu0 0.0
        %603 = vmatpush1.msra.mxu0 0.0
        %604 = vmatprep.subr.mxu0 0.0
        %605 = vmatpush1.msra.mxu0 0.0
        %606 = vmatprep.subr.mxu0 0.0
        %607 = vmatpush1.msra.mxu0 0.0
        %608 = vmatprep.subr.mxu0 0.0
        %609 = vmatpush1.msra.mxu0 0.0
        %610 = vmatprep.subr.mxu0 0.0
        %611 = vmatpush1.msra.mxu0 0.0
        %612 = vmatprep.subr.mxu0 0.0
        %613 = vmatpush1.msra.mxu0 0.0
        %614 = vmatprep.subr.mxu0 0.0
        %615 = vmatpush1.msra.mxu0 0.0
        %616 = vmatprep.subr.mxu0 0.0
        %617 = vmatpush1.msra.mxu0 0.0
        %618 = vmatprep.subr.mxu0 0.0
        %619 = vmatpush1.msra.mxu0 0.0
        %620 = vmatprep.subr.mxu0 0.0
        %621 = vmatpush1.msra.mxu0 0.0
        %622 = vmatprep.mubr.f32.mxu0 0.0
        %623 = vmatmul.mubr.f32.gmra.mrb[0].mxu0 %v473
        %v624 = vpop.f32.mrb[0].mxu0
        %v625 = vadd.f32 0.0, %v624
        %v626 = vpop.f32.mrb[0].mxu0
        %627 = vmatprep.mubr.f32.mxu0 0.0
        %628 = vmatmul.mubr.f32.gmra.mrb[0].mxu0 %v476
        %v629 = vpop.f32.mrb[0].mxu0
        %v630 = vadd.f32 0.0, %v629
        %v631 = vpop.f32.mrb[0].mxu0
        %632 = vdwg.mxu0
        %s633 = scalar_lea.vmem %s2, 64
        %v634 = vld [vmem:[%s633] sm:$0xff]
        %v635 = vld [vmem:[%s633 + $0x8] sm:$0xff]
        %v636 = vld [vmem:[%s633 + $0x10] sm:$0xff]
        %v637 = vld [vmem:[%s633 + $0x18] sm:$0xff]
        %638 = vmatprep.subr.mxu0 0.0
        %639 = vmatpush1.msra.mxu0 %v634
        %640 = vmatprep.subr.mxu0 0.0
        %641 = vmatpush1.msra.mxu0 %v635
        %642 = vmatprep.subr.mxu0 0.0
        %643 = vmatpush1.msra.mxu0 %v636
        %644 = vmatprep.subr.mxu0 0.0
        %645 = vmatpush1.msra.mxu0 %v637
        %646 = vmatprep.subr.mxu0 0.0
        %647 = vmatpush1.msra.mxu0 0.0
        %648 = vmatprep.subr.mxu0 0.0
        %649 = vmatpush1.msra.mxu0 0.0
        %650 = vmatprep.subr.mxu0 0.0
        %651 = vmatpush1.msra.mxu0 0.0
        %652 = vmatprep.subr.mxu0 0.0
        %653 = vmatpush1.msra.mxu0 0.0
        %654 = vmatprep.subr.mxu0 0.0
        %655 = vmatpush1.msra.mxu0 0.0
        %656 = vmatprep.subr.mxu0 0.0
        %657 = vmatpush1.msra.mxu0 0.0
        %658 = vmatprep.subr.mxu0 0.0
        %659 = vmatpush1.msra.mxu0 0.0
        %660 = vmatprep.subr.mxu0 0.0
        %661 = vmatpush1.msra.mxu0 0.0
        %662 = vmatprep.subr.mxu0 0.0
        %663 = vmatpush1.msra.mxu0 0.0
        %664 = vmatprep.subr.mxu0 0.0
        %665 = vmatpush1.msra.mxu0 0.0
        %666 = vmatprep.subr.mxu0 0.0
        %667 = vmatpush1.msra.mxu0 0.0
        %668 = vmatprep.subr.mxu0 0.0
        %669 = vmatpush1.msra.mxu0 0.0
        %670 = vmatprep.subr.mxu0 0.0
        %671 = vmatpush1.msra.mxu0 0.0
        %672 = vmatprep.subr.mxu0 0.0
        %673 = vmatpush1.msra.mxu0 0.0
        %674 = vmatprep.subr.mxu0 0.0
        %675 = vmatpush1.msra.mxu0 0.0
        %676 = vmatprep.subr.mxu0 0.0
        %677 = vmatpush1.msra.mxu0 0.0
        %678 = vmatprep.subr.mxu0 0.0
        %679 = vmatpush1.msra.mxu0 0.0
        %680 = vmatprep.subr.mxu0 0.0
        %681 = vmatpush1.msra.mxu0 0.0
        %682 = vmatprep.subr.mxu0 0.0
        %683 = vmatpush1.msra.mxu0 0.0
        %684 = vmatprep.subr.mxu0 0.0
        %685 = vmatpush1.msra.mxu0 0.0
        %686 = vmatprep.subr.mxu0 0.0
        %687 = vmatpush1.msra.mxu0 0.0
        %688 = vmatprep.subr.mxu0 0.0
        %689 = vmatpush1.msra.mxu0 0.0
        %690 = vmatprep.subr.mxu0 0.0
        %691 = vmatpush1.msra.mxu0 0.0
        %692 = vmatprep.subr.mxu0 0.0
        %693 = vmatpush1.msra.mxu0 0.0
        %694 = vmatprep.subr.mxu0 0.0
        %695 = vmatpush1.msra.mxu0 0.0
        %696 = vmatprep.subr.mxu0 0.0
        %697 = vmatpush1.msra.mxu0 0.0
        %698 = vmatprep.subr.mxu0 0.0
        %699 = vmatpush1.msra.mxu0 0.0
        %700 = vmatprep.subr.mxu0 0.0
        %701 = vmatpush1.msra.mxu0 0.0
        %702 = vmatprep.mubr.f32.mxu0 0.0
        %703 = vmatmul.mubr.f32.gmra.mrb[0].mxu0 %v473
        %v704 = vpop.f32.mrb[0].mxu0
        %v705 = vadd.f32 0.0, %v704
        %v706 = vpop.f32.mrb[0].mxu0
        %707 = vmatprep.mubr.f32.mxu0 0.0
        %708 = vmatmul.mubr.f32.gmra.mrb[0].mxu0 %v476
        %v709 = vpop.f32.mrb[0].mxu0
        %v710 = vadd.f32 0.0, %v709
        %v711 = vpop.f32.mrb[0].mxu0
        %712 = vdwg.mxu0
        %v713 = vmul.f32 %v545, 0.35355338
        %v714 = vmul.f32 %v550, 0.35355338
        %vm715 = vcmask 64512
        %v717 = vsel %vm715, %v713, 0
        %v720 = vsel %vm715, %v714, 0
        %v723 = vsel %vm715, %v625, 0
        %v726 = vsel %vm715, %v630, 0
        %728 = vmatprep.subr.mxu0 0.0
        %729 = vmatpush1.xpose.msra.mxu0 %v723
        %730 = vmatprep.subr.mxu0 0.0
        %731 = vmatpush1.xpose.msra.mxu0 %v726
        %732 = vmatprep.subr.mxu0 0.0
        %733 = vmatpush1.xpose.msra.mxu0 0.0
        %734 = vmatprep.subr.mxu0 0.0
        %735 = vmatpush1.xpose.msra.mxu0 0.0
        %736 = vmatprep.subr.mxu0 0.0
        %737 = vmatpush1.xpose.msra.mxu0 0.0
        %738 = vmatprep.subr.mxu0 0.0
        %739 = vmatpush1.xpose.msra.mxu0 0.0
        %740 = vmatprep.subr.mxu0 0.0
        %741 = vmatpush1.xpose.msra.mxu0 0.0
        %742 = vmatprep.subr.mxu0 0.0
        %743 = vmatpush1.xpose.msra.mxu0 0.0
        %744 = vmatprep.subr.mxu0 0.0
        %745 = vmatpush1.xpose.msra.mxu0 0.0
        %746 = vmatprep.subr.mxu0 0.0
        %747 = vmatpush1.xpose.msra.mxu0 0.0
        %748 = vmatprep.subr.mxu0 0.0
        %749 = vmatpush1.xpose.msra.mxu0 0.0
        %750 = vmatprep.subr.mxu0 0.0
        %751 = vmatpush1.xpose.msra.mxu0 0.0
        %752 = vmatprep.subr.mxu0 0.0
        %753 = vmatpush1.xpose.msra.mxu0 0.0
        %754 = vmatprep.subr.mxu0 0.0
        %755 = vmatpush1.xpose.msra.mxu0 0.0
        %756 = vmatprep.subr.mxu0 0.0
        %757 = vmatpush1.xpose.msra.mxu0 0.0
        %758 = vmatprep.subr.mxu0 0.0
        %759 = vmatpush1.xpose.msra.mxu0 0.0
        %760 = vmatprep.subr.mxu0 0.0
        %761 = vmatpush1.xpose.msra.mxu0 0.0
        %762 = vmatprep.subr.mxu0 0.0
        %763 = vmatpush1.xpose.msra.mxu0 0.0
        %764 = vmatprep.subr.mxu0 0.0
        %765 = vmatpush1.xpose.msra.mxu0 0.0
        %766 = vmatprep.subr.mxu0 0.0
        %767 = vmatpush1.xpose.msra.mxu0 0.0
        %768 = vmatprep.subr.mxu0 0.0
        %769 = vmatpush1.xpose.msra.mxu0 0.0
        %770 = vmatprep.subr.mxu0 0.0
        %771 = vmatpush1.xpose.msra.mxu0 0.0
        %772 = vmatprep.subr.mxu0 0.0
        %773 = vmatpush1.xpose.msra.mxu0 0.0
        %774 = vmatprep.subr.mxu0 0.0
        %775 = vmatpush1.xpose.msra.mxu0 0.0
        %776 = vmatprep.subr.mxu0 0.0
        %777 = vmatpush1.xpose.msra.mxu0 0.0
        %778 = vmatprep.subr.mxu0 0.0
        %779 = vmatpush1.xpose.msra.mxu0 0.0
        %780 = vmatprep.subr.mxu0 0.0
        %781 = vmatpush1.xpose.msra.mxu0 0.0
        %782 = vmatprep.subr.mxu0 0.0
        %783 = vmatpush1.xpose.msra.mxu0 0.0
        %784 = vmatprep.subr.mxu0 0.0
        %785 = vmatpush1.xpose.msra.mxu0 0.0
        %786 = vmatprep.subr.mxu0 0.0
        %787 = vmatpush1.xpose.msra.mxu0 0.0
        %788 = vmatprep.subr.mxu0 0.0
        %789 = vmatpush1.xpose.msra.mxu0 0.0
        %790 = vmatprep.subr.mxu0 0.0
        %791 = vmatpush1.xpose.msra.mxu0 0.0
        %792 = vmatprep.mubr.f32.mxu0 0.0
        %793 = vmatmul.mubr.f32.gmra.mrb[0].mxu0 %v717
        %v794 = vpop.f32.mrb[0].mxu0
        %v795 = vadd.f32 %v465, %v794
        %v796 = vpop.f32.mrb[0].mxu0
        %797 = vmatprep.mubr.f32.mxu0 0.0
        %798 = vmatmul.mubr.f32.gmra.mrb[0].mxu0 %v720
        %v799 = vpop.f32.mrb[0].mxu0
        %v800 = vadd.f32 %v466, %v799
        %v801 = vpop.f32.mrb[0].mxu0
        %802 = vdwg.mxu0
        %vm803 = vcmask 130048
        %v804 = vsel %vm803, %v795, -inf
        %805 = vmax.xlane.f32.xlu0 %v804
        %v806 = vpop.xlane.xlu0 %805
        %v807 = vsel %vm803, %v800, -inf
        %808 = vmax.xlane.f32.xlu0 %v807
        %v809 = vpop.xlane.xlu0 %808
        %v810 = vsub.f32 %v795, %v806
        %v811 = vsub.f32 %v800, %v809
        %v812 = vmul.f32 %v810, 1.442695
        %v813 = vpow.pop %v812
        %v814 = vmul.f32 %v811, 1.442695
        %v815 = vpow.pop %v814
        %v816 = vsel %vm803, %v813, 0.0
        %817 = vadd.xlane.f32.xlu0 %v816
        %v818 = vpop.xlane.xlu0 %817
        %v819 = vsel %vm803, %v815, 0.0
        %820 = vadd.xlane.f32.xlu0 %v819
        %v821 = vpop.xlane.xlu0 %820
        %v822 = vrcp.pop %v818
        %v823 = vmul.f32 %v813, %v822
        %v824 = vrcp.pop %v821
        %v825 = vmul.f32 %v815, %v824
        %v827 = vsel %vm803, %v823, 0
        %v830 = vsel %vm803, %v825, 0
        %832 = vmatprep.subr.mxu0 0.0
        %833 = vmatpush1.msra.mxu0 %v705
        %834 = vmatprep.subr.mxu0 0.0
        %835 = vmatpush1.msra.mxu0 %v710
        %836 = vmatprep.subr.mxu0 0.0
        %837 = vmatpush1.msra.mxu0 0.0
        %838 = vmatprep.subr.mxu0 0.0
        %839 = vmatpush1.msra.mxu0 0.0
        %840 = vmatprep.subr.mxu0 0.0
        %841 = vmatpush1.msra.mxu0 0.0
        %842 = vmatprep.subr.mxu0 0.0
        %843 = vmatpush1.msra.mxu0 0.0
        %844 = vmatprep.subr.mxu0 0.0
        %845 = vmatpush1.msra.mxu0 0.0
        %846 = vmatprep.subr.mxu0 0.0
        %847 = vmatpush1.msra.mxu0 0.0
        %848 = vmatprep.subr.mxu0 0.0
        %849 = vmatpush1.msra.mxu0 0.0
        %850 = vmatprep.subr.mxu0 0.0
        %851 = vmatpush1.msra.mxu0 0.0
        %852 = vmatprep.subr.mxu0 0.0
        %853 = vmatpush1.msra.mxu0 0.0
        %854 = vmatprep.subr.mxu0 0.0
        %855 = vmatpush1.msra.mxu0 0.0
        %856 = vmatprep.subr.mxu0 0.0
        %857 = vmatpush1.msra.mxu0 0.0
        %858 = vmatprep.subr.mxu0 0.0
        %859 = vmatpush1.msra.mxu0 0.0
        %860 = vmatprep.subr.mxu0 0.0
        %861 = vmatpush1.msra.mxu0 0.0
        %862 = vmatprep.subr.mxu0 0.0
        %863 = vmatpush1.msra.mxu0 0.0
        %864 = vmatprep.subr.mxu0 0.0
        %865 = vmatpush1.msra.mxu0 0.0
        %866 = vmatprep.subr.mxu0 0.0
        %867 = vmatpush1.msra.mxu0 0.0
        %868 = vmatprep.subr.mxu0 0.0
        %869 = vmatpush1.msra.mxu0 0.0
        %870 = vmatprep.subr.mxu0 0.0
        %871 = vmatpush1.msra.mxu0 0.0
        %872 = vmatprep.subr.mxu0 0.0
        %873 = vmatpush1.msra.mxu0 0.0
        %874 = vmatprep.subr.mxu0 0.0
        %875 = vmatpush1.msra.mxu0 0.0
        %876 = vmatprep.subr.mxu0 0.0
        %877 = vmatpush1.msra.mxu0 0.0
        %878 = vmatprep.subr.mxu0 0.0
        %879 = vmatpush1.msra.mxu0 0.0
        %880 = vmatprep.subr.mxu0 0.0
        %881 = vmatpush1.msra.mxu0 0.0
        %882 = vmatprep.subr.mxu0 0.0
        %883 = vmatpush1.msra.mxu0 0.0
        %884 = vmatprep.subr.mxu0 0.0
        %885 = vmatpush1.msra.mxu0 0.0
        %886 = vmatprep.subr.mxu0 0.0
        %887 = vmatpush1.msra.mxu0 0.0
        %888 = vmatprep.subr.mxu0 0.0
        %889 = vmatpush1.msra.mxu0 0.0
        %890 = vmatprep.subr.mxu0 0.0
        %891 = vmatpush1.msra.mxu0 0.0
        %892 = vmatprep.subr.mxu0 0.0
        %893 = vmatpush1.msra.mxu0 0.0
        %894 = vmatprep.subr.mxu0 0.0
        %895 = vmatpush1.msra.mxu0 0.0
        %896 = vmatprep.mubr.f32.mxu0 0.0
        %897 = vmatmul.mubr.f32.gmra.mrb[0].mxu0 %v827
        %v898 = vpop.f32.mrb[0].mxu0
        %v899 = vadd.f32 0.0, %v898
        %v900 = vpop.f32.mrb[0].mxu0
        %901 = vmatprep.mubr.f32.mxu0 0.0
        %902 = vmatmul.mubr.f32.gmra.mrb[0].mxu0 %v830
        %v903 = vpop.f32.mrb[0].mxu0
        %v904 = vadd.f32 0.0, %v903
        %v905 = vpop.f32.mrb[0].mxu0
        %906 = vdwg.mxu0
        %907 = vrot.lane.b32.xlu0 %v713, 120
        %v908 = vpop.permute.xlu0 %907
        %909 = vrot.lane.b32.xlu0 %v714, 120
        %v910 = vpop.permute.xlu0 %909
        %911 = vrot.lane.b32.xlu0 %v625, 120
        %v912 = vpop.permute.xlu0 %911
        %913 = vrot.lane.b32.xlu0 %v630, 120
        %v914 = vpop.permute.xlu0 %913
        %v915 = vsel %vm715, %v908, 0
        %v917 = vsel %vm715, %v910, 0
        %v919 = vsel %vm715, %v912, 0
        %v921 = vsel %vm715, %v914, 0
        %923 = vmatprep.subr.mxu0 0.0
        %924 = vmatpush1.xpose.msra.mxu0 %v919
        %925 = vmatprep.subr.mxu0 0.0
        %926 = vmatpush1.xpose.msra.mxu0 %v921
        %927 = vmatprep.subr.mxu0 0.0
        %928 = vmatpush1.xpose.msra.mxu0 0.0
        %929 = vmatprep.subr.mxu0 0.0
        %930 = vmatpush1.xpose.msra.mxu0 0.0
        %931 = vmatprep.subr.mxu0 0.0
        %932 = vmatpush1.xpose.msra.mxu0 0.0
        %933 = vmatprep.subr.mxu0 0.0
        %934 = vmatpush1.xpose.msra.mxu0 0.0
        %935 = vmatprep.subr.mxu0 0.0
        %936 = vmatpush1.xpose.msra.mxu0 0.0
        %937 = vmatprep.subr.mxu0 0.0
        %938 = vmatpush1.xpose.msra.mxu0 0.0
        %939 = vmatprep.subr.mxu0 0.0
        %940 = vmatpush1.xpose.msra.mxu0 0.0
        %941 = vmatprep.subr.mxu0 0.0
        %942 = vmatpush1.xpose.msra.mxu0 0.0
        %943 = vmatprep.subr.mxu0 0.0
        %944 = vmatpush1.xpose.msra.mxu0 0.0
        %945 = vmatprep.subr.mxu0 0.0
        %946 = vmatpush1.xpose.msra.mxu0 0.0
        %947 = vmatprep.subr.mxu0 0.0
        %948 = vmatpush1.xpose.msra.mxu0 0.0
        %949 = vmatprep.subr.mxu0 0.0
        %950 = vmatpush1.xpose.msra.mxu0 0.0
        %951 = vmatprep.subr.mxu0 0.0
        %952 = vmatpush1.xpose.msra.mxu0 0.0
        %953 = vmatprep.subr.mxu0 0.0
        %954 = vmatpush1.xpose.msra.mxu0 0.0
        %955 = vmatprep.subr.mxu0 0.0
        %956 = vmatpush1.xpose.msra.mxu0 0.0
        %957 = vmatprep.subr.mxu0 0.0
        %958 = vmatpush1.xpose.msra.mxu0 0.0
        %959 = vmatprep.subr.mxu0 0.0
        %960 = vmatpush1.xpose.msra.mxu0 0.0
        %961 = vmatprep.subr.mxu0 0.0
        %962 = vmatpush1.xpose.msra.mxu0 0.0
        %963 = vmatprep.subr.mxu0 0.0
        %964 = vmatpush1.xpose.msra.mxu0 0.0
        %965 = vmatprep.subr.mxu0 0.0
        %966 = vmatpush1.xpose.msra.mxu0 0.0
        %967 = vmatprep.subr.mxu0 0.0
        %968 = vmatpush1.xpose.msra.mxu0 0.0
        %969 = vmatprep.subr.mxu0 0.0
        %970 = vmatpush1.xpose.msra.mxu0 0.0
        %971 = vmatprep.subr.mxu0 0.0
        %972 = vmatpush1.xpose.msra.mxu0 0.0
        %973 = vmatprep.subr.mxu0 0.0
        %974 = vmatpush1.xpose.msra.mxu0 0.0
        %975 = vmatprep.subr.mxu0 0.0
        %976 = vmatpush1.xpose.msra.mxu0 0.0
        %977 = vmatprep.subr.mxu0 0.0
        %978 = vmatpush1.xpose.msra.mxu0 0.0
        %979 = vmatprep.subr.mxu0 0.0
        %980 = vmatpush1.xpose.msra.mxu0 0.0
        %981 = vmatprep.subr.mxu0 0.0
        %982 = vmatpush1.xpose.msra.mxu0 0.0
        %983 = vmatprep.subr.mxu0 0.0
        %984 = vmatpush1.xpose.msra.mxu0 0.0
        %985 = vmatprep.subr.mxu0 0.0
        %986 = vmatpush1.xpose.msra.mxu0 0.0
        %987 = vmatprep.mubr.f32.mxu0 0.0
        %988 = vmatmul.mubr.f32.gmra.mrb[0].mxu0 %v915
        %v989 = vpop.f32.mrb[0].mxu0
        %v990 = vadd.f32 %v465, %v989
        %v991 = vpop.f32.mrb[0].mxu0
        %992 = vmatprep.mubr.f32.mxu0 0.0
        %993 = vmatmul.mubr.f32.gmra.mrb[0].mxu0 %v917
        %v994 = vpop.f32.mrb[0].mxu0
        %v995 = vadd.f32 %v466, %v994
        %v996 = vpop.f32.mrb[0].mxu0
        %997 = vdwg.mxu0
        %v998 = vsel %vm803, %v990, -inf
        %999 = vmax.xlane.f32.xlu0 %v998
        %v1000 = vpop.xlane.xlu0 %999
        %v1001 = vsel %vm803, %v995, -inf
        %1002 = vmax.xlane.f32.xlu0 %v1001
        %v1003 = vpop.xlane.xlu0 %1002
        %v1004 = vsub.f32 %v990, %v1000
        %v1005 = vsub.f32 %v995, %v1003
        %v1006 = vmul.f32 %v1004, 1.442695
        %v1007 = vpow.pop %v1006
        %v1008 = vmul.f32 %v1005, 1.442695
        %v1009 = vpow.pop %v1008
        %v1010 = vsel %vm803, %v1007, 0.0
        %1011 = vadd.xlane.f32.xlu0 %v1010
        %v1012 = vpop.xlane.xlu0 %1011
        %v1013 = vsel %vm803, %v1009, 0.0
        %1014 = vadd.xlane.f32.xlu0 %v1013
        %v1015 = vpop.xlane.xlu0 %1014
        %v1016 = vrcp.pop %v1012
        %v1017 = vmul.f32 %v1007, %v1016
        %v1018 = vrcp.pop %v1015
        %v1019 = vmul.f32 %v1009, %v1018
        %1022 = vrot.lane.b32.xlu0 %v705, 120
        %v1023 = vpop.permute.xlu0 %1022
        %1024 = vrot.lane.b32.xlu0 %v710, 120
        %v1025 = vpop.permute.xlu0 %1024
        %v1029 = vsel %vm803, %v1017, 0
        %v1032 = vsel %vm803, %v1019, 0
        %1034 = vmatprep.subr.mxu0 0.0
        %1035 = vmatpush1.msra.mxu0 %v1023
        %1036 = vmatprep.subr.mxu0 0.0
        %1037 = vmatpush1.msra.mxu0 %v1025
        %1038 = vmatprep.subr.mxu0 0.0
        %1039 = vmatpush1.msra.mxu0 0.0
        %1040 = vmatprep.subr.mxu0 0.0
        %1041 = vmatpush1.msra.mxu0 0.0
        %1042 = vmatprep.subr.mxu0 0.0
        %1043 = vmatpush1.msra.mxu0 0.0
        %1044 = vmatprep.subr.mxu0 0.0
        %1045 = vmatpush1.msra.mxu0 0.0
        %1046 = vmatprep.subr.mxu0 0.0
        %1047 = vmatpush1.msra.mxu0 0.0
        %1048 = vmatprep.subr.mxu0 0.0
        %1049 = vmatpush1.msra.mxu0 0.0
        %1050 = vmatprep.subr.mxu0 0.0
        %1051 = vmatpush1.msra.mxu0 0.0
        %1052 = vmatprep.subr.mxu0 0.0
        %1053 = vmatpush1.msra.mxu0 0.0
        %1054 = vmatprep.subr.mxu0 0.0
        %1055 = vmatpush1.msra.mxu0 0.0
        %1056 = vmatprep.subr.mxu0 0.0
        %1057 = vmatpush1.msra.mxu0 0.0
        %1058 = vmatprep.subr.mxu0 0.0
        %1059 = vmatpush1.msra.mxu0 0.0
        %1060 = vmatprep.subr.mxu0 0.0
        %1061 = vmatpush1.msra.mxu0 0.0
        %1062 = vmatprep.subr.mxu0 0.0
        %1063 = vmatpush1.msra.mxu0 0.0
        %1064 = vmatprep.subr.mxu0 0.0
        %1065 = vmatpush1.msra.mxu0 0.0
        %1066 = vmatprep.subr.mxu0 0.0
        %1067 = vmatpush1.msra.mxu0 0.0
        %1068 = vmatprep.subr.mxu0 0.0
        %1069 = vmatpush1.msra.mxu0 0.0
        %1070 = vmatprep.subr.mxu0 0.0
        %1071 = vmatpush1.msra.mxu0 0.0
        %1072 = vmatprep.subr.mxu0 0.0
        %1073 = vmatpush1.msra.mxu0 0.0
        %1074 = vmatprep.subr.mxu0 0.0
        %1075 = vmatpush1.msra.mxu0 0.0
        %1076 = vmatprep.subr.mxu0 0.0
        %1077 = vmatpush1.msra.mxu0 0.0
        %1078 = vmatprep.subr.mxu0 0.0
        %1079 = vmatpush1.msra.mxu0 0.0
        %1080 = vmatprep.subr.mxu0 0.0
        %1081 = vmatpush1.msra.mxu0 0.0
        %1082 = vmatprep.subr.mxu0 0.0
        %1083 = vmatpush1.msra.mxu0 0.0
        %1084 = vmatprep.subr.mxu0 0.0
        %1085 = vmatpush1.msra.mxu0 0.0
        %1086 = vmatprep.subr.mxu0 0.0
        %1087 = vmatpush1.msra.mxu0 0.0
        %1088 = vmatprep.subr.mxu0 0.0
        %1089 = vmatpush1.msra.mxu0 0.0
        %1090 = vmatprep.subr.mxu0 0.0
        %1091 = vmatpush1.msra.mxu0 0.0
        %1092 = vmatprep.subr.mxu0 0.0
        %1093 = vmatpush1.msra.mxu0 0.0
        %1094 = vmatprep.subr.mxu0 0.0
        %1095 = vmatpush1.msra.mxu0 0.0
        %1096 = vmatprep.subr.mxu0 0.0
        %1097 = vmatpush1.msra.mxu0 0.0
        %1098 = vmatprep.mubr.f32.mxu0 0.0
        %1099 = vmatmul.mubr.f32.gmra.mrb[0].mxu0 %v1029
        %v1100 = vpop.f32.mrb[0].mxu0
        %v1101 = vadd.f32 0.0, %v1100
        %v1102 = vpop.f32.mrb[0].mxu0
        %1103 = vmatprep.mubr.f32.mxu0 0.0
        %1104 = vmatmul.mubr.f32.gmra.mrb[0].mxu0 %v1032
        %v1105 = vpop.f32.mrb[0].mxu0
        %v1106 = vadd.f32 0.0, %v1105
        %v1107 = vpop.f32.mrb[0].mxu0
        %1108 = vdwg.mxu0
        %1109 = vrot.lane.b32.xlu0 %v713, 112
        %v1110 = vpop.permute.xlu0 %1109
        %1111 = vrot.lane.b32.xlu0 %v714, 112
        %v1112 = vpop.permute.xlu0 %1111
        %1113 = vrot.lane.b32.xlu0 %v625, 112
        %v1114 = vpop.permute.xlu0 %1113
        %1115 = vrot.lane.b32.xlu0 %v630, 112
        %v1116 = vpop.permute.xlu0 %1115
        %v1117 = vsel %vm715, %v1110, 0
        %v1119 = vsel %vm715, %v1112, 0
        %v1121 = vsel %vm715, %v1114, 0
        %v1123 = vsel %vm715, %v1116, 0
        %1125 = vmatprep.subr.mxu0 0.0
        %1126 = vmatpush1.xpose.msra.mxu0 %v1121
        %1127 = vmatprep.subr.mxu0 0.0
        %1128 = vmatpush1.xpose.msra.mxu0 %v1123
        %1129 = vmatprep.subr.mxu0 0.0
        %1130 = vmatpush1.xpose.msra.mxu0 0.0
        %1131 = vmatprep.subr.mxu0 0.0
        %1132 = vmatpush1.xpose.msra.mxu0 0.0
        %1133 = vmatprep.subr.mxu0 0.0
        %1134 = vmatpush1.xpose.msra.mxu0 0.0
        %1135 = vmatprep.subr.mxu0 0.0
        %1136 = vmatpush1.xpose.msra.mxu0 0.0
        %1137 = vmatprep.subr.mxu0 0.0
        %1138 = vmatpush1.xpose.msra.mxu0 0.0
        %1139 = vmatprep.subr.mxu0 0.0
        %1140 = vmatpush1.xpose.msra.mxu0 0.0
        %1141 = vmatprep.subr.mxu0 0.0
        %1142 = vmatpush1.xpose.msra.mxu0 0.0
        %1143 = vmatprep.subr.mxu0 0.0
        %1144 = vmatpush1.xpose.msra.mxu0 0.0
        %1145 = vmatprep.subr.mxu0 0.0
        %1146 = vmatpush1.xpose.msra.mxu0 0.0
        %1147 = vmatprep.subr.mxu0 0.0
        %1148 = vmatpush1.xpose.msra.mxu0 0.0
        %1149 = vmatprep.subr.mxu0 0.0
        %1150 = vmatpush1.xpose.msra.mxu0 0.0
        %1151 = vmatprep.subr.mxu0 0.0
        %1152 = vmatpush1.xpose.msra.mxu0 0.0
        %1153 = vmatprep.subr.mxu0 0.0
        %1154 = vmatpush1.xpose.msra.mxu0 0.0
        %1155 = vmatprep.subr.mxu0 0.0
        %1156 = vmatpush1.xpose.msra.mxu0 0.0
        %1157 = vmatprep.subr.mxu0 0.0
        %1158 = vmatpush1.xpose.msra.mxu0 0.0
        %1159 = vmatprep.subr.mxu0 0.0
        %1160 = vmatpush1.xpose.msra.mxu0 0.0
        %1161 = vmatprep.subr.mxu0 0.0
        %1162 = vmatpush1.xpose.msra.mxu0 0.0
        %1163 = vmatprep.subr.mxu0 0.0
        %1164 = vmatpush1.xpose.msra.mxu0 0.0
        %1165 = vmatprep.subr.mxu0 0.0
        %1166 = vmatpush1.xpose.msra.mxu0 0.0
        %1167 = vmatprep.subr.mxu0 0.0
        %1168 = vmatpush1.xpose.msra.mxu0 0.0
        %1169 = vmatprep.subr.mxu0 0.0
        %1170 = vmatpush1.xpose.msra.mxu0 0.0
        %1171 = vmatprep.subr.mxu0 0.0
        %1172 = vmatpush1.xpose.msra.mxu0 0.0
        %1173 = vmatprep.subr.mxu0 0.0
        %1174 = vmatpush1.xpose.msra.mxu0 0.0
        %1175 = vmatprep.subr.mxu0 0.0
        %1176 = vmatpush1.xpose.msra.mxu0 0.0
        %1177 = vmatprep.subr.mxu0 0.0
        %1178 = vmatpush1.xpose.msra.mxu0 0.0
        %1179 = vmatprep.subr.mxu0 0.0
        %1180 = vmatpush1.xpose.msra.mxu0 0.0
        %1181 = vmatprep.subr.mxu0 0.0
        %1182 = vmatpush1.xpose.msra.mxu0 0.0
        %1183 = vmatprep.subr.mxu0 0.0
        %1184 = vmatpush1.xpose.msra.mxu0 0.0
        %1185 = vmatprep.subr.mxu0 0.0
        %1186 = vmatpush1.xpose.msra.mxu0 0.0
        %1187 = vmatprep.subr.mxu0 0.0
        %1188 = vmatpush1.xpose.msra.mxu0 0.0
        %1189 = vmatprep.mubr.f32.mxu0 0.0
        %1190 = vmatmul.mubr.f32.gmra.mrb[0].mxu0 %v1117
        %v1191 = vpop.f32.mrb[0].mxu0
        %v1192 = vadd.f32 %v465, %v1191
        %v1193 = vpop.f32.mrb[0].mxu0
        %1194 = vmatprep.mubr.f32.mxu0 0.0
        %1195 = vmatmul.mubr.f32.gmra.mrb[0].mxu0 %v1119
        %v1196 = vpop.f32.mrb[0].mxu0
        %v1197 = vadd.f32 %v466, %v1196
        %v1198 = vpop.f32.mrb[0].mxu0
        %1199 = vdwg.mxu0
        %v1200 = vsel %vm803, %v1192, -inf
        %1201 = vmax.xlane.f32.xlu0 %v1200
        %v1202 = vpop.xlane.xlu0 %1201
        %v1203 = vsel %vm803, %v1197, -inf
        %1204 = vmax.xlane.f32.xlu0 %v1203
        %v1205 = vpop.xlane.xlu0 %1204
        %v1206 = vsub.f32 %v1192, %v1202
        %v1207 = vsub.f32 %v1197, %v1205
        %v1208 = vmul.f32 %v1206, 1.442695
        %v1209 = vpow.pop %v1208
        %v1210 = vmul.f32 %v1207, 1.442695
        %v1211 = vpow.pop %v1210
        %v1212 = vsel %vm803, %v1209, 0.0
        %1213 = vadd.xlane.f32.xlu0 %v1212
        %v1214 = vpop.xlane.xlu0 %1213
        %v1215 = vsel %vm803, %v1211, 0.0
        %1216 = vadd.xlane.f32.xlu0 %v1215
        %v1217 = vpop.xlane.xlu0 %1216
        %v1218 = vrcp.pop %v1214
        %v1219 = vmul.f32 %v1209, %v1218
        %v1220 = vrcp.pop %v1217
        %v1221 = vmul.f32 %v1211, %v1220
        %1222 = vrot.lane.b32.xlu0 %v705, 112
        %v1223 = vpop.permute.xlu0 %1222
        %1224 = vrot.lane.b32.xlu0 %v710, 112
        %v1225 = vpop.permute.xlu0 %1224
        %v1229 = vsel %vm803, %v1219, 0
        %v1232 = vsel %vm803, %v1221, 0
        %1234 = vmatprep.subr.mxu0 0.0
        %1235 = vmatpush1.msra.mxu0 %v1223
        %1236 = vmatprep.subr.mxu0 0.0
        %1237 = vmatpush1.msra.mxu0 %v1225
        %1238 = vmatprep.subr.mxu0 0.0
        %1239 = vmatpush1.msra.mxu0 0.0
        %1240 = vmatprep.subr.mxu0 0.0
        %1241 = vmatpush1.msra.mxu0 0.0
        %1242 = vmatprep.subr.mxu0 0.0
        %1243 = vmatpush1.msra.mxu0 0.0
        %1244 = vmatprep.subr.mxu0 0.0
        %1245 = vmatpush1.msra.mxu0 0.0
        %1246 = vmatprep.subr.mxu0 0.0
        %1247 = vmatpush1.msra.mxu0 0.0
        %1248 = vmatprep.subr.mxu0 0.0
        %1249 = vmatpush1.msra.mxu0 0.0
        %1250 = vmatprep.subr.mxu0 0.0
        %1251 = vmatpush1.msra.mxu0 0.0
        %1252 = vmatprep.subr.mxu0 0.0
        %1253 = vmatpush1.msra.mxu0 0.0
        %1254 = vmatprep.subr.mxu0 0.0
        %1255 = vmatpush1.msra.mxu0 0.0
        %1256 = vmatprep.subr.mxu0 0.0
        %1257 = vmatpush1.msra.mxu0 0.0
        %1258 = vmatprep.subr.mxu0 0.0
        %1259 = vmatpush1.msra.mxu0 0.0
        %1260 = vmatprep.subr.mxu0 0.0
        %1261 = vmatpush1.msra.mxu0 0.0
        %1262 = vmatprep.subr.mxu0 0.0
        %1263 = vmatpush1.msra.mxu0 0.0
        %1264 = vmatprep.subr.mxu0 0.0
        %1265 = vmatpush1.msra.mxu0 0.0
        %1266 = vmatprep.subr.mxu0 0.0
        %1267 = vmatpush1.msra.mxu0 0.0
        %1268 = vmatprep.subr.mxu0 0.0
        %1269 = vmatpush1.msra.mxu0 0.0
        %1270 = vmatprep.subr.mxu0 0.0
        %1271 = vmatpush1.msra.mxu0 0.0
        %1272 = vmatprep.subr.mxu0 0.0
        %1273 = vmatpush1.msra.mxu0 0.0
        %1274 = vmatprep.subr.mxu0 0.0
        %1275 = vmatpush1.msra.mxu0 0.0
        %1276 = vmatprep.subr.mxu0 0.0
        %1277 = vmatpush1.msra.mxu0 0.0
        %1278 = vmatprep.subr.mxu0 0.0
        %1279 = vmatpush1.msra.mxu0 0.0
        %1280 = vmatprep.subr.mxu0 0.0
        %1281 = vmatpush1.msra.mxu0 0.0
        %1282 = vmatprep.subr.mxu0 0.0
        %1283 = vmatpush1.msra.mxu0 0.0
        %1284 = vmatprep.subr.mxu0 0.0
        %1285 = vmatpush1.msra.mxu0 0.0
        %1286 = vmatprep.subr.mxu0 0.0
        %1287 = vmatpush1.msra.mxu0 0.0
        %1288 = vmatprep.subr.mxu0 0.0
        %1289 = vmatpush1.msra.mxu0 0.0
        %1290 = vmatprep.subr.mxu0 0.0
        %1291 = vmatpush1.msra.mxu0 0.0
        %1292 = vmatprep.subr.mxu0 0.0
        %1293 = vmatpush1.msra.mxu0 0.0
        %1294 = vmatprep.subr.mxu0 0.0
        %1295 = vmatpush1.msra.mxu0 0.0
        %1296 = vmatprep.subr.mxu0 0.0
        %1297 = vmatpush1.msra.mxu0 0.0
        %1298 = vmatprep.mubr.f32.mxu0 0.0
        %1299 = vmatmul.mubr.f32.gmra.mrb[0].mxu0 %v1229
        %v1300 = vpop.f32.mrb[0].mxu0
        %v1301 = vadd.f32 0.0, %v1300
        %v1302 = vpop.f32.mrb[0].mxu0
        %1303 = vmatprep.mubr.f32.mxu0 0.0
        %1304 = vmatmul.mubr.f32.gmra.mrb[0].mxu0 %v1232
        %v1305 = vpop.f32.mrb[0].mxu0
        %v1306 = vadd.f32 0.0, %v1305
        %v1307 = vpop.f32.mrb[0].mxu0
        %1308 = vdwg.mxu0
        %1309 = vrot.lane.b32.xlu0 %v713, 104
        %v1310 = vpop.permute.xlu0 %1309
        %1311 = vrot.lane.b32.xlu0 %v714, 104
        %v1312 = vpop.permute.xlu0 %1311
        %1313 = vrot.lane.b32.xlu0 %v625, 104
        %v1314 = vpop.permute.xlu0 %1313
        %1315 = vrot.lane.b32.xlu0 %v630, 104
        %v1316 = vpop.permute.xlu0 %1315
        %v1317 = vsel %vm715, %v1310, 0
        %v1319 = vsel %vm715, %v1312, 0
        %v1321 = vsel %vm715, %v1314, 0
        %v1323 = vsel %vm715, %v1316, 0
        %1325 = vmatprep.subr.mxu0 0.0
        %1326 = vmatpush1.xpose.msra.mxu0 %v1321
        %1327 = vmatprep.subr.mxu0 0.0
        %1328 = vmatpush1.xpose.msra.mxu0 %v1323
        %1329 = vmatprep.subr.mxu0 0.0
        %1330 = vmatpush1.xpose.msra.mxu0 0.0
        %1331 = vmatprep.subr.mxu0 0.0
        %1332 = vmatpush1.xpose.msra.mxu0 0.0
        %1333 = vmatprep.subr.mxu0 0.0
        %1334 = vmatpush1.xpose.msra.mxu0 0.0
        %1335 = vmatprep.subr.mxu0 0.0
        %1336 = vmatpush1.xpose.msra.mxu0 0.0
        %1337 = vmatprep.subr.mxu0 0.0
        %1338 = vmatpush1.xpose.msra.mxu0 0.0
        %1339 = vmatprep.subr.mxu0 0.0
        %1340 = vmatpush1.xpose.msra.mxu0 0.0
        %1341 = vmatprep.subr.mxu0 0.0
        %1342 = vmatpush1.xpose.msra.mxu0 0.0
        %1343 = vmatprep.subr.mxu0 0.0
        %1344 = vmatpush1.xpose.msra.mxu0 0.0
        %1345 = vmatprep.subr.mxu0 0.0
        %1346 = vmatpush1.xpose.msra.mxu0 0.0
        %1347 = vmatprep.subr.mxu0 0.0
        %1348 = vmatpush1.xpose.msra.mxu0 0.0
        %1349 = vmatprep.subr.mxu0 0.0
        %1350 = vmatpush1.xpose.msra.mxu0 0.0
        %1351 = vmatprep.subr.mxu0 0.0
        %1352 = vmatpush1.xpose.msra.mxu0 0.0
        %1353 = vmatprep.subr.mxu0 0.0
        %1354 = vmatpush1.xpose.msra.mxu0 0.0
        %1355 = vmatprep.subr.mxu0 0.0
        %1356 = vmatpush1.xpose.msra.mxu0 0.0
        %1357 = vmatprep.subr.mxu0 0.0
        %1358 = vmatpush1.xpose.msra.mxu0 0.0
        %1359 = vmatprep.subr.mxu0 0.0
        %1360 = vmatpush1.xpose.msra.mxu0 0.0
        %1361 = vmatprep.subr.mxu0 0.0
        %1362 = vmatpush1.xpose.msra.mxu0 0.0
        %1363 = vmatprep.subr.mxu0 0.0
        %1364 = vmatpush1.xpose.msra.mxu0 0.0
        %1365 = vmatprep.subr.mxu0 0.0
        %1366 = vmatpush1.xpose.msra.mxu0 0.0
        %1367 = vmatprep.subr.mxu0 0.0
        %1368 = vmatpush1.xpose.msra.mxu0 0.0
        %1369 = vmatprep.subr.mxu0 0.0
        %1370 = vmatpush1.xpose.msra.mxu0 0.0
        %1371 = vmatprep.subr.mxu0 0.0
        %1372 = vmatpush1.xpose.msra.mxu0 0.0
        %1373 = vmatprep.subr.mxu0 0.0
        %1374 = vmatpush1.xpose.msra.mxu0 0.0
        %1375 = vmatprep.subr.mxu0 0.0
        %1376 = vmatpush1.xpose.msra.mxu0 0.0
        %1377 = vmatprep.subr.mxu0 0.0
        %1378 = vmatpush1.xpose.msra.mxu0 0.0
        %1379 = vmatprep.subr.mxu0 0.0
        %1380 = vmatpush1.xpose.msra.mxu0 0.0
        %1381 = vmatprep.subr.mxu0 0.0
        %1382 = vmatpush1.xpose.msra.mxu0 0.0
        %1383 = vmatprep.subr.mxu0 0.0
        %1384 = vmatpush1.xpose.msra.mxu0 0.0
        %1385 = vmatprep.subr.mxu0 0.0
        %1386 = vmatpush1.xpose.msra.mxu0 0.0
        %1387 = vmatprep.subr.mxu0 0.0
        %1388 = vmatpush1.xpose.msra.mxu0 0.0
        %1389 = vmatprep.mubr.f32.mxu0 0.0
        %1390 = vmatmul.mubr.f32.gmra.mrb[0].mxu0 %v1317
        %v1391 = vpop.f32.mrb[0].mxu0
        %v1392 = vadd.f32 %v465, %v1391
        %v1393 = vpop.f32.mrb[0].mxu0
        %1394 = vmatprep.mubr.f32.mxu0 0.0
        %1395 = vmatmul.mubr.f32.gmra.mrb[0].mxu0 %v1319
        %v1396 = vpop.f32.mrb[0].mxu0
        %v1397 = vadd.f32 %v466, %v1396
        %v1398 = vpop.f32.mrb[0].mxu0
        %1399 = vdwg.mxu0
        %v1400 = vsel %vm803, %v1392, -inf
        %1401 = vmax.xlane.f32.xlu0 %v1400
        %v1402 = vpop.xlane.xlu0 %1401
        %v1403 = vsel %vm803, %v1397, -inf
        %1404 = vmax.xlane.f32.xlu0 %v1403
        %v1405 = vpop.xlane.xlu0 %1404
        %v1406 = vsub.f32 %v1392, %v1402
        %v1407 = vsub.f32 %v1397, %v1405
        %v1408 = vmul.f32 %v1406, 1.442695
        %v1409 = vpow.pop %v1408
        %v1410 = vmul.f32 %v1407, 1.442695
        %v1411 = vpow.pop %v1410
        %v1412 = vsel %vm803, %v1409, 0.0
        %1413 = vadd.xlane.f32.xlu0 %v1412
        %v1414 = vpop.xlane.xlu0 %1413
        %v1415 = vsel %vm803, %v1411, 0.0
        %1416 = vadd.xlane.f32.xlu0 %v1415
        %v1417 = vpop.xlane.xlu0 %1416
        %v1418 = vrcp.pop %v1414
        %v1419 = vmul.f32 %v1409, %v1418
        %v1420 = vrcp.pop %v1417
        %v1421 = vmul.f32 %v1411, %v1420
        %1422 = vrot.lane.b32.xlu0 %v705, 104
        %v1423 = vpop.permute.xlu0 %1422
        %1424 = vrot.lane.b32.xlu0 %v710, 104
        %v1425 = vpop.permute.xlu0 %1424
        %v1429 = vsel %vm803, %v1419, 0
        %v1432 = vsel %vm803, %v1421, 0
        %1434 = vmatprep.subr.mxu0 0.0
        %1435 = vmatpush1.msra.mxu0 %v1423
        %1436 = vmatprep.subr.mxu0 0.0
        %1437 = vmatpush1.msra.mxu0 %v1425
        %1438 = vmatprep.subr.mxu0 0.0
        %1439 = vmatpush1.msra.mxu0 0.0
        %1440 = vmatprep.subr.mxu0 0.0
        %1441 = vmatpush1.msra.mxu0 0.0
        %1442 = vmatprep.subr.mxu0 0.0
        %1443 = vmatpush1.msra.mxu0 0.0
        %1444 = vmatprep.subr.mxu0 0.0
        %1445 = vmatpush1.msra.mxu0 0.0
        %1446 = vmatprep.subr.mxu0 0.0
        %1447 = vmatpush1.msra.mxu0 0.0
        %1448 = vmatprep.subr.mxu0 0.0
        %1449 = vmatpush1.msra.mxu0 0.0
        %1450 = vmatprep.subr.mxu0 0.0
        %1451 = vmatpush1.msra.mxu0 0.0
        %1452 = vmatprep.subr.mxu0 0.0
        %1453 = vmatpush1.msra.mxu0 0.0
        %1454 = vmatprep.subr.mxu0 0.0
        %1455 = vmatpush1.msra.mxu0 0.0
        %1456 = vmatprep.subr.mxu0 0.0
        %1457 = vmatpush1.msra.mxu0 0.0
        %1458 = vmatprep.subr.mxu0 0.0
        %1459 = vmatpush1.msra.mxu0 0.0
        %1460 = vmatprep.subr.mxu0 0.0
        %1461 = vmatpush1.msra.mxu0 0.0
        %1462 = vmatprep.subr.mxu0 0.0
        %1463 = vmatpush1.msra.mxu0 0.0
        %1464 = vmatprep.subr.mxu0 0.0
        %1465 = vmatpush1.msra.mxu0 0.0
        %1466 = vmatprep.subr.mxu0 0.0
        %1467 = vmatpush1.msra.mxu0 0.0
        %1468 = vmatprep.subr.mxu0 0.0
        %1469 = vmatpush1.msra.mxu0 0.0
        %1470 = vmatprep.subr.mxu0 0.0
        %1471 = vmatpush1.msra.mxu0 0.0
        %1472 = vmatprep.subr.mxu0 0.0
        %1473 = vmatpush1.msra.mxu0 0.0
        %1474 = vmatprep.subr.mxu0 0.0
        %1475 = vmatpush1.msra.mxu0 0.0
        %1476 = vmatprep.subr.mxu0 0.0
        %1477 = vmatpush1.msra.mxu0 0.0
        %1478 = vmatprep.subr.mxu0 0.0
        %1479 = vmatpush1.msra.mxu0 0.0
        %1480 = vmatprep.subr.mxu0 0.0
        %1481 = vmatpush1.msra.mxu0 0.0
        %1482 = vmatprep.subr.mxu0 0.0
        %1483 = vmatpush1.msra.mxu0 0.0
        %1484 = vmatprep.subr.mxu0 0.0
        %1485 = vmatpush1.msra.mxu0 0.0
        %1486 = vmatprep.subr.mxu0 0.0
        %1487 = vmatpush1.msra.mxu0 0.0
        %1488 = vmatprep.subr.mxu0 0.0
        %1489 = vmatpush1.msra.mxu0 0.0
        %1490 = vmatprep.subr.mxu0 0.0
        %1491 = vmatpush1.msra.mxu0 0.0
        %1492 = vmatprep.subr.mxu0 0.0
        %1493 = vmatpush1.msra.mxu0 0.0
        %1494 = vmatprep.subr.mxu0 0.0
        %1495 = vmatpush1.msra.mxu0 0.0
        %1496 = vmatprep.subr.mxu0 0.0
        %1497 = vmatpush1.msra.mxu0 0.0
        %1498 = vmatprep.mubr.f32.mxu0 0.0
        %1499 = vmatmul.mubr.f32.gmra.mrb[0].mxu0 %v1429
        %v1500 = vpop.f32.mrb[0].mxu0
        %v1501 = vadd.f32 0.0, %v1500
        %v1502 = vpop.f32.mrb[0].mxu0
        %1503 = vmatprep.mubr.f32.mxu0 0.0
        %1504 = vmatmul.mubr.f32.gmra.mrb[0].mxu0 %v1432
        %v1505 = vpop.f32.mrb[0].mxu0
        %v1506 = vadd.f32 0.0, %v1505
        %v1507 = vpop.f32.mrb[0].mxu0
        %1508 = vdwg.mxu0
        %1511 = vrot.lane.b32.xlu0 %v1101, 8
        %v1512 = vpop.permute.xlu0 %1511
        %1513 = vrot.lane.b32.xlu0 %v1106, 8
        %v1514 = vpop.permute.xlu0 %1513
        %1519 = vrot.lane.b32.xlu0 %v1301, 16
        %v1520 = vpop.permute.xlu0 %1519
        %1521 = vrot.lane.b32.xlu0 %v1306, 16
        %v1522 = vpop.permute.xlu0 %1521
        %1527 = vrot.lane.b32.xlu0 %v1501, 24
        %v1528 = vpop.permute.xlu0 %1527
        %1529 = vrot.lane.b32.xlu0 %v1506, 24
        %v1530 = vpop.permute.xlu0 %1529
        %v1533 = vsel %vm715, %v899, %v1512
        %v1534 = vsel %vm715, %v904, %v1514
        %v1535 = vsel %vm803, %v1533, %v1520
        %v1536 = vsel %vm803, %v1534, %v1522
        %vm1537 = vcmask 195584
        %v1538 = vsel %vm1537, %v1535, %v1528
        %v1539 = vsel %vm1537, %v1536, %v1530
        %v1540 = vld [vmem:[#allocation12] sm:$0xff]
        %v1541 = vld [vmem:[#allocation12 + $0x8] sm:$0xff]
        %v1542 = vld [vmem:[#allocation12 + $0x10] sm:$0xff]
        %v1543 = vld [vmem:[#allocation12 + $0x18] sm:$0xff]
        %v1545 = vsel %vm471, %v1538, 0
        %v1548 = vsel %vm471, %v1539, 0
        %1550 = vmatprep.subr.mxu0 0.0
        %1551 = vmatpush1.msra.mxu0 %v1540
        %1552 = vmatprep.subr.mxu0 0.0
        %1553 = vmatpush1.msra.mxu0 %v1541
        %1554 = vmatprep.subr.mxu0 0.0
        %1555 = vmatpush1.msra.mxu0 %v1542
        %1556 = vmatprep.subr.mxu0 0.0
        %1557 = vmatpush1.msra.mxu0 %v1543
        %1558 = vmatprep.subr.mxu0 0.0
        %1559 = vmatpush1.msra.mxu0 0.0
        %1560 = vmatprep.subr.mxu0 0.0
        %1561 = vmatpush1.msra.mxu0 0.0
        %1562 = vmatprep.subr.mxu0 0.0
        %1563 = vmatpush1.msra.mxu0 0.0
        %1564 = vmatprep.subr.mxu0 0.0
        %1565 = vmatpush1.msra.mxu0 0.0
        %1566 = vmatprep.subr.mxu0 0.0
        %1567 = vmatpush1.msra.mxu0 0.0
        %1568 = vmatprep.subr.mxu0 0.0
        %1569 = vmatpush1.msra.mxu0 0.0
        %1570 = vmatprep.subr.mxu0 0.0
        %1571 = vmatpush1.msra.mxu0 0.0
        %1572 = vmatprep.subr.mxu0 0.0
        %1573 = vmatpush1.msra.mxu0 0.0
        %1574 = vmatprep.subr.mxu0 0.0
        %1575 = vmatpush1.msra.mxu0 0.0
        %1576 = vmatprep.subr.mxu0 0.0
        %1577 = vmatpush1.msra.mxu0 0.0
        %1578 = vmatprep.subr.mxu0 0.0
        %1579 = vmatpush1.msra.mxu0 0.0
        %1580 = vmatprep.subr.mxu0 0.0
        %1581 = vmatpush1.msra.mxu0 0.0
        %1582 = vmatprep.subr.mxu0 0.0
        %1583 = vmatpush1.msra.mxu0 0.0
        %1584 = vmatprep.subr.mxu0 0.0
        %1585 = vmatpush1.msra.mxu0 0.0
        %1586 = vmatprep.subr.mxu0 0.0
        %1587 = vmatpush1.msra.mxu0 0.0
        %1588 = vmatprep.subr.mxu0 0.0
        %1589 = vmatpush1.msra.mxu0 0.0
        %1590 = vmatprep.subr.mxu0 0.0
        %1591 = vmatpush1.msra.mxu0 0.0
        %1592 = vmatprep.subr.mxu0 0.0
        %1593 = vmatpush1.msra.mxu0 0.0
        %1594 = vmatprep.subr.mxu0 0.0
        %1595 = vmatpush1.msra.mxu0 0.0
        %1596 = vmatprep.subr.mxu0 0.0
        %1597 = vmatpush1.msra.mxu0 0.0
        %1598 = vmatprep.subr.mxu0 0.0
        %1599 = vmatpush1.msra.mxu0 0.0
        %1600 = vmatprep.subr.mxu0 0.0
        %1601 = vmatpush1.msra.mxu0 0.0
        %1602 = vmatprep.subr.mxu0 0.0
        %1603 = vmatpush1.msra.mxu0 0.0
        %1604 = vmatprep.subr.mxu0 0.0
        %1605 = vmatpush1.msra.mxu0 0.0
        %1606 = vmatprep.subr.mxu0 0.0
        %1607 = vmatpush1.msra.mxu0 0.0
        %1608 = vmatprep.subr.mxu0 0.0
        %1609 = vmatpush1.msra.mxu0 0.0
        %1610 = vmatprep.subr.mxu0 0.0
        %1611 = vmatpush1.msra.mxu0 0.0
        %1612 = vmatprep.subr.mxu0 0.0
        %1613 = vmatpush1.msra.mxu0 0.0
        %1614 = vmatprep.mubr.f32.mxu0 0.0
        %1615 = vmatmul.mubr.f32.gmra.mrb[0].mxu0 %v1545
        %v1616 = vpop.f32.mrb[0].mxu0
        %v1617 = vadd.f32 0.0, %v1616
        %v1618 = vpop.f32.mrb[0].mxu0
        %1619 = vmatprep.mubr.f32.mxu0 0.0
        %1620 = vmatmul.mubr.f32.gmra.mrb[0].mxu0 %v1548
        %v1621 = vpop.f32.mrb[0].mxu0
        %v1622 = vadd.f32 0.0, %v1621
        %v1623 = vpop.f32.mrb[0].mxu0
        %1624 = vdwg.mxu0
        %v1625 = vadd.f32 %v463, %v1617
        %v1626 = vadd.f32 %v464, %v1622
        %v1627 = vld [vmem:[%s4] sm:$0x1]
        %s1628 = scalar_lea.vmem %s4, 1
        %v1629 = vld [vmem:[%s1628] sm:$0x1]
        %v1630 = vsel %vm471, %v1625, 0.0
        %1631 = vadd.xlane.f32.xlu0 %v1630
        %v1632 = vpop.xlane.xlu0 %1631
        %v1633 = vsel %vm471, %v1626, 0.0
        %1634 = vadd.xlane.f32.xlu0 %v1633
        %v1635 = vpop.xlane.xlu0 %1634
        %v1636 = vrcp.pop 32.0
        %v1637 = vmul.f32 %v1632, %v1636
        %v1638 = vmul.f32 %v1635, %v1636
        %v1639 = vsub.f32 %v1625, %v1637
        %v1640 = vsub.f32 %v1626, %v1638
        %v1641 = vmul.f32 %v1639, %v1639
        %v1642 = vmul.f32 %v1640, %v1640
        %v1643 = vsel %vm471, %v1641, 0.0
        %1644 = vadd.xlane.f32.xlu0 %v1643
        %v1645 = vpop.xlane.xlu0 %1644
        %v1646 = vsel %vm471, %v1642, 0.0
        %1647 = vadd.xlane.f32.xlu0 %v1646
        %v1648 = vpop.xlane.xlu0 %1647
        %v1649 = vmul.f32 %v1645, %v1636
        %v1650 = vmul.f32 %v1648, %v1636
        %v1651 = vadd.f32 %v1649, 1e-06
        %v1652 = vadd.f32 %v1650, 1e-06
        %v1653 = vrsqrt.pop %v1651
        %v1654 = vrsqrt.pop %v1652
        %v1655 = vmul.f32 %v1639, %v1653
        %v1656 = vmul.f32 %v1640, %v1654
        %v1658 = vlaneseq
        %v1659 = vshrl.u32 %v1658, 7
        %v1660 = vsub.s32 0, %v1659
        %v1661 = vrot.slane %v1627, %v1660
        %v1663 = vmul.f32 %v1655, %v1661
        %v1664 = vmul.f32 %v1656, %v1661
        %v1666 = vlaneseq
        %v1667 = vshrl.u32 %v1666, 7
        %v1668 = vsub.s32 0, %v1667
        %v1669 = vrot.slane %v1629, %v1668
        %v1671 = vadd.f32 %v1663, %v1669
        %v1672 = vadd.f32 %v1664, %v1669
        %v1673 = vld [vmem:[#allocation13] sm:$0xff]
        %v1674 = vld [vmem:[#allocation13 + $0x8] sm:$0xff]
        %v1675 = vld [vmem:[#allocation13 + $0x10] sm:$0xff]
        %v1676 = vld [vmem:[#allocation13 + $0x18] sm:$0xff]
        %v1677 = vld [vmem:[%s7] sm:$0x1]
        %v1679 = vlaneseq
        %v1680 = vshrl.u32 %v1679, 7
        %v1681 = vsub.s32 0, %v1680
        %v1682 = vrot.slane %v1677, %v1681
        %v1685 = vsel %vm471, %v1671, 0
        %v1688 = vsel %vm471, %v1672, 0
        %1690 = vmatprep.subr.mxu0 0.0
        %1691 = vmatpush1.msra.mxu0 %v1673
        %1692 = vmatprep.subr.mxu0 0.0
        %1693 = vmatpush1.msra.mxu0 %v1674
        %1694 = vmatprep.subr.mxu0 0.0
        %1695 = vmatpush1.msra.mxu0 %v1675
        %1696 = vmatprep.subr.mxu0 0.0
        %1697 = vmatpush1.msra.mxu0 %v1676
        %1698 = vmatprep.subr.mxu0 0.0
        %1699 = vmatpush1.msra.mxu0 0.0
        %1700 = vmatprep.subr.mxu0 0.0
        %1701 = vmatpush1.msra.mxu0 0.0
        %1702 = vmatprep.subr.mxu0 0.0
        %1703 = vmatpush1.msra.mxu0 0.0
        %1704 = vmatprep.subr.mxu0 0.0
        %1705 = vmatpush1.msra.mxu0 0.0
        %1706 = vmatprep.subr.mxu0 0.0
        %1707 = vmatpush1.msra.mxu0 0.0
        %1708 = vmatprep.subr.mxu0 0.0
        %1709 = vmatpush1.msra.mxu0 0.0
        %1710 = vmatprep.subr.mxu0 0.0
        %1711 = vmatpush1.msra.mxu0 0.0
        %1712 = vmatprep.subr.mxu0 0.0
        %1713 = vmatpush1.msra.mxu0 0.0
        %1714 = vmatprep.subr.mxu0 0.0
        %1715 = vmatpush1.msra.mxu0 0.0
        %1716 = vmatprep.subr.mxu0 0.0
        %1717 = vmatpush1.msra.mxu0 0.0
        %1718 = vmatprep.subr.mxu0 0.0
        %1719 = vmatpush1.msra.mxu0 0.0
        %1720 = vmatprep.subr.mxu0 0.0
        %1721 = vmatpush1.msra.mxu0 0.0
        %1722 = vmatprep.subr.mxu0 0.0
        %1723 = vmatpush1.msra.mxu0 0.0
        %1724 = vmatprep.subr.mxu0 0.0
        %1725 = vmatpush1.msra.mxu0 0.0
        %1726 = vmatprep.subr.mxu0 0.0
        %1727 = vmatpush1.msra.mxu0 0.0
        %1728 = vmatprep.subr.mxu0 0.0
        %1729 = vmatpush1.msra.mxu0 0.0
        %1730 = vmatprep.subr.mxu0 0.0
        %1731 = vmatpush1.msra.mxu0 0.0
        %1732 = vmatprep.subr.mxu0 0.0
        %1733 = vmatpush1.msra.mxu0 0.0
        %1734 = vmatprep.subr.mxu0 0.0
        %1735 = vmatpush1.msra.mxu0 0.0
        %1736 = vmatprep.subr.mxu0 0.0
        %1737 = vmatpush1.msra.mxu0 0.0
        %1738 = vmatprep.subr.mxu0 0.0
        %1739 = vmatpush1.msra.mxu0 0.0
        %1740 = vmatprep.subr.mxu0 0.0
        %1741 = vmatpush1.msra.mxu0 0.0
        %1742 = vmatprep.subr.mxu0 0.0
        %1743 = vmatpush1.msra.mxu0 0.0
        %1744 = vmatprep.subr.mxu0 0.0
        %1745 = vmatpush1.msra.mxu0 0.0
        %1746 = vmatprep.subr.mxu0 0.0
        %1747 = vmatpush1.msra.mxu0 0.0
        %1748 = vmatprep.subr.mxu0 0.0
        %1749 = vmatpush1.msra.mxu0 0.0
        %1750 = vmatprep.subr.mxu0 0.0
        %1751 = vmatpush1.msra.mxu0 0.0
        %1752 = vmatprep.subr.mxu0 0.0
        %1753 = vmatpush1.msra.mxu0 0.0
        %1754 = vmatprep.mubr.f32.mxu0 0.0
        %1755 = vmatmul.mubr.f32.gmra.mrb[0].mxu0 %v1685
        %v1756 = vpop.f32.mrb[0].mxu0
        %v1757 = vadd.f32 %v1682, %v1756
        %v1758 = vpop.f32.mrb[0].mxu0
        %1759 = vmatprep.mubr.f32.mxu0 0.0
        %1760 = vmatmul.mubr.f32.gmra.mrb[0].mxu0 %v1688
        %v1761 = vpop.f32.mrb[0].mxu0
        %v1762 = vadd.f32 %v1682, %v1761
        %v1763 = vpop.f32.mrb[0].mxu0
        %1764 = vdwg.mxu0
        %vm1765 = vcmask 523264
        %1766 = vst.msk [vmem:[#allocation2] sm:$0xff] %vm1765, %v1757
        %1767 = vst.msk [vmem:[#allocation2 + $0x8] sm:$0xff] %vm1765, %v1762
        %s1768 = scalar_lea.vmem [#allocation13], 32
        %v1769 = vld [vmem:[%s1768] sm:$0xff]
        %v1770 = vld [vmem:[%s1768 + $0x8] sm:$0xff]
        %v1771 = vld [vmem:[%s1768 + $0x10] sm:$0xff]
        %v1772 = vld [vmem:[%s1768 + $0x18] sm:$0xff]
        %s1773 = scalar_lea.vmem %s7, 1
        %v1774 = vld [vmem:[%s1773] sm:$0x1]
        %v1776 = vlaneseq
        %v1777 = vshrl.u32 %v1776, 7
        %v1778 = vsub.s32 0, %v1777
        %v1779 = vrot.slane %v1774, %v1778
        %1781 = vmatprep.subr.mxu0 0.0
        %1782 = vmatpush1.msra.mxu0 %v1769
        %1783 = vmatprep.subr.mxu0 0.0
        %1784 = vmatpush1.msra.mxu0 %v1770
        %1785 = vmatprep.subr.mxu0 0.0
        %1786 = vmatpush1.msra.mxu0 %v1771
        %1787 = vmatprep.subr.mxu0 0.0
        %1788 = vmatpush1.msra.mxu0 %v1772
        %1789 = vmatprep.subr.mxu0 0.0
        %1790 = vmatpush1.msra.mxu0 0.0
        %1791 = vmatprep.subr.mxu0 0.0
        %1792 = vmatpush1.msra.mxu0 0.0
        %1793 = vmatprep.subr.mxu0 0.0
        %1794 = vmatpush1.msra.mxu0 0.0
        %1795 = vmatprep.subr.mxu0 0.0
        %1796 = vmatpush1.msra.mxu0 0.0
        %1797 = vmatprep.subr.mxu0 0.0
        %1798 = vmatpush1.msra.mxu0 0.0
        %1799 = vmatprep.subr.mxu0 0.0
        %1800 = vmatpush1.msra.mxu0 0.0
        %1801 = vmatprep.subr.mxu0 0.0
        %1802 = vmatpush1.msra.mxu0 0.0
        %1803 = vmatprep.subr.mxu0 0.0
        %1804 = vmatpush1.msra.mxu0 0.0
        %1805 = vmatprep.subr.mxu0 0.0
        %1806 = vmatpush1.msra.mxu0 0.0
        %1807 = vmatprep.subr.mxu0 0.0
        %1808 = vmatpush1.msra.mxu0 0.0
        %1809 = vmatprep.subr.mxu0 0.0
        %1810 = vmatpush1.msra.mxu0 0.0
        %1811 = vmatprep.subr.mxu0 0.0
        %1812 = vmatpush1.msra.mxu0 0.0
        %1813 = vmatprep.subr.mxu0 0.0
        %1814 = vmatpush1.msra.mxu0 0.0
        %1815 = vmatprep.subr.mxu0 0.0
        %1816 = vmatpush1.msra.mxu0 0.0
        %1817 = vmatprep.subr.mxu0 0.0
        %1818 = vmatpush1.msra.mxu0 0.0
        %1819 = vmatprep.subr.mxu0 0.0
        %1820 = vmatpush1.msra.mxu0 0.0
        %1821 = vmatprep.subr.mxu0 0.0
        %1822 = vmatpush1.msra.mxu0 0.0
        %1823 = vmatprep.subr.mxu0 0.0
        %1824 = vmatpush1.msra.mxu0 0.0
        %1825 = vmatprep.subr.mxu0 0.0
        %1826 = vmatpush1.msra.mxu0 0.0
        %1827 = vmatprep.subr.mxu0 0.0
        %1828 = vmatpush1.msra.mxu0 0.0
        %1829 = vmatprep.subr.mxu0 0.0
        %1830 = vmatpush1.msra.mxu0 0.0
        %1831 = vmatprep.subr.mxu0 0.0
        %1832 = vmatpush1.msra.mxu0 0.0
        %1833 = vmatprep.subr.mxu0 0.0
        %1834 = vmatpush1.msra.mxu0 0.0
        %1835 = vmatprep.subr.mxu0 0.0
        %1836 = vmatpush1.msra.mxu0 0.0
        %1837 = vmatprep.subr.mxu0 0.0
        %1838 = vmatpush1.msra.mxu0 0.0
        %1839 = vmatprep.subr.mxu0 0.0
        %1840 = vmatpush1.msra.mxu0 0.0
        %1841 = vmatprep.subr.mxu0 0.0
        %1842 = vmatpush1.msra.mxu0 0.0
        %1843 = vmatprep.subr.mxu0 0.0
        %1844 = vmatpush1.msra.mxu0 0.0
        %1845 = vmatprep.mubr.f32.mxu0 0.0
        %1846 = vmatmul.mubr.f32.gmra.mrb[0].mxu0 %v1685
        %v1847 = vpop.f32.mrb[0].mxu0
        %v1848 = vadd.f32 %v1779, %v1847
        %v1849 = vpop.f32.mrb[0].mxu0
        %1850 = vmatprep.mubr.f32.mxu0 0.0
        %1851 = vmatmul.mubr.f32.gmra.mrb[0].mxu0 %v1688
        %v1852 = vpop.f32.mrb[0].mxu0
        %v1853 = vadd.f32 %v1779, %v1852
        %v1854 = vpop.f32.mrb[0].mxu0
        %1855 = vdwg.mxu0
        %1856 = vst.msk [vmem:[#allocation3] sm:$0xff] %vm1765, %v1848
        %1857 = vst.msk [vmem:[#allocation3 + $0x8] sm:$0xff] %vm1765, %v1853
        %s1858 = scalar_lea.vmem [#allocation13], 64
        %v1859 = vld [vmem:[%s1858] sm:$0xff]
        %v1860 = vld [vmem:[%s1858 + $0x8] sm:$0xff]
        %v1861 = vld [vmem:[%s1858 + $0x10] sm:$0xff]
        %v1862 = vld [vmem:[%s1858 + $0x18] sm:$0xff]
        %s1863 = scalar_lea.vmem %s7, 2
        %v1864 = vld [vmem:[%s1863] sm:$0x1]
        %v1866 = vlaneseq
        %v1867 = vshrl.u32 %v1866, 7
        %v1868 = vsub.s32 0, %v1867
        %v1869 = vrot.slane %v1864, %v1868
        %1871 = vmatprep.subr.mxu0 0.0
        %1872 = vmatpush1.msra.mxu0 %v1859
        %1873 = vmatprep.subr.mxu0 0.0
        %1874 = vmatpush1.msra.mxu0 %v1860
        %1875 = vmatprep.subr.mxu0 0.0
        %1876 = vmatpush1.msra.mxu0 %v1861
        %1877 = vmatprep.subr.mxu0 0.0
        %1878 = vmatpush1.msra.mxu0 %v1862
        %1879 = vmatprep.subr.mxu0 0.0
        %1880 = vmatpush1.msra.mxu0 0.0
        %1881 = vmatprep.subr.mxu0 0.0
        %1882 = vmatpush1.msra.mxu0 0.0
        %1883 = vmatprep.subr.mxu0 0.0
        %1884 = vmatpush1.msra.mxu0 0.0
        %1885 = vmatprep.subr.mxu0 0.0
        %1886 = vmatpush1.msra.mxu0 0.0
        %1887 = vmatprep.subr.mxu0 0.0
        %1888 = vmatpush1.msra.mxu0 0.0
        %1889 = vmatprep.subr.mxu0 0.0
        %1890 = vmatpush1.msra.mxu0 0.0
        %1891 = vmatprep.subr.mxu0 0.0
        %1892 = vmatpush1.msra.mxu0 0.0
        %1893 = vmatprep.subr.mxu0 0.0
        %1894 = vmatpush1.msra.mxu0 0.0
        %1895 = vmatprep.subr.mxu0 0.0
        %1896 = vmatpush1.msra.mxu0 0.0
        %1897 = vmatprep.subr.mxu0 0.0
        %1898 = vmatpush1.msra.mxu0 0.0
        %1899 = vmatprep.subr.mxu0 0.0
        %1900 = vmatpush1.msra.mxu0 0.0
        %1901 = vmatprep.subr.mxu0 0.0
        %1902 = vmatpush1.msra.mxu0 0.0
        %1903 = vmatprep.subr.mxu0 0.0
        %1904 = vmatpush1.msra.mxu0 0.0
        %1905 = vmatprep.subr.mxu0 0.0
        %1906 = vmatpush1.msra.mxu0 0.0
        %1907 = vmatprep.subr.mxu0 0.0
        %1908 = vmatpush1.msra.mxu0 0.0
        %1909 = vmatprep.subr.mxu0 0.0
        %1910 = vmatpush1.msra.mxu0 0.0
        %1911 = vmatprep.subr.mxu0 0.0
        %1912 = vmatpush1.msra.mxu0 0.0
        %1913 = vmatprep.subr.mxu0 0.0
        %1914 = vmatpush1.msra.mxu0 0.0
        %1915 = vmatprep.subr.mxu0 0.0
        %1916 = vmatpush1.msra.mxu0 0.0
        %1917 = vmatprep.subr.mxu0 0.0
        %1918 = vmatpush1.msra.mxu0 0.0
        %1919 = vmatprep.subr.mxu0 0.0
        %1920 = vmatpush1.msra.mxu0 0.0
        %1921 = vmatprep.subr.mxu0 0.0
        %1922 = vmatpush1.msra.mxu0 0.0
        %1923 = vmatprep.subr.mxu0 0.0
        %1924 = vmatpush1.msra.mxu0 0.0
        %1925 = vmatprep.subr.mxu0 0.0
        %1926 = vmatpush1.msra.mxu0 0.0
        %1927 = vmatprep.subr.mxu0 0.0
        %1928 = vmatpush1.msra.mxu0 0.0
        %1929 = vmatprep.subr.mxu0 0.0
        %1930 = vmatpush1.msra.mxu0 0.0
        %1931 = vmatprep.subr.mxu0 0.0
        %1932 = vmatpush1.msra.mxu0 0.0
        %1933 = vmatprep.subr.mxu0 0.0
        %1934 = vmatpush1.msra.mxu0 0.0
        %1935 = vmatprep.mubr.f32.mxu0 0.0
        %1936 = vmatmul.mubr.f32.gmra.mrb[0].mxu0 %v1685
        %v1937 = vpop.f32.mrb[0].mxu0
        %v1938 = vadd.f32 %v1869, %v1937
        %v1939 = vpop.f32.mrb[0].mxu0
        %1940 = vmatprep.mubr.f32.mxu0 0.0
        %1941 = vmatmul.mubr.f32.gmra.mrb[0].mxu0 %v1688
        %v1942 = vpop.f32.mrb[0].mxu0
        %v1943 = vadd.f32 %v1869, %v1942
        %v1944 = vpop.f32.mrb[0].mxu0
        %1945 = vdwg.mxu0
        %1946 = vst.msk [vmem:[#allocation4] sm:$0xff] %vm1765, %v1938
        %1947 = vst.msk [vmem:[#allocation4 + $0x8] sm:$0xff] %vm1765, %v1943
        %vm1948 = vcmask 516096
        %1949 = vst.msk [vmem:[#allocation5] sm:$0x1] %vm1948, 0.0
        %v1950 = vld [vmem:[#allocation15] sm:$0xff]
        %v1951 = vld [vmem:[#allocation15 + $0x8] sm:$0xff]
        %v1952 = vld [vmem:[#allocation15 + $0x10] sm:$0xff]
        %v1953 = vld [vmem:[#allocation15 + $0x18] sm:$0xff]
        %v1954 = vld [vmem:[#allocation15 + $0x20] sm:$0xff]
        %v1955 = vld [vmem:[#allocation15 + $0x28] sm:$0xff]
        %v1956 = vld [vmem:[#allocation15 + $0x30] sm:$0xff]
        %v1957 = vld [vmem:[#allocation15 + $0x38] sm:$0xff]
        %s1958 = scalar_lea.vmem [#allocation15], 64
        %v1959 = vld [vmem:[%s1958] sm:$0xff]
        %v1960 = vld [vmem:[%s1958 + $0x8] sm:$0xff]
        %v1961 = vld [vmem:[%s1958 + $0x10] sm:$0xff]
        %v1962 = vld [vmem:[%s1958 + $0x18] sm:$0xff]
        %v1963 = vld [vmem:[%s1958 + $0x20] sm:$0xff]
        %v1964 = vld [vmem:[%s1958 + $0x28] sm:$0xff]
        %v1965 = vld [vmem:[%s1958 + $0x30] sm:$0xff]
        %v1966 = vld [vmem:[%s1958 + $0x38] sm:$0xff]
        %s1967 = scalar_lea.vmem [#allocation15], 128
        %v1968 = vld [vmem:[%s1967] sm:$0xff]
        %v1969 = vld [vmem:[%s1967 + $0x8] sm:$0xff]
        %v1970 = vld [vmem:[%s1967 + $0x10] sm:$0xff]
        %v1971 = vld [vmem:[%s1967 + $0x18] sm:$0xff]
        %v1972 = vld [vmem:[%s1967 + $0x20] sm:$0xff]
        %v1973 = vld [vmem:[%s1967 + $0x28] sm:$0xff]
        %v1974 = vld [vmem:[%s1967 + $0x30] sm:$0xff]
        %v1975 = vld [vmem:[%s1967 + $0x38] sm:$0xff]
        %s1976 = scalar_lea.vmem %s7, 3
        %v1977 = vld [vmem:[%s1976] sm:$0x1]
        loop: start=0, step=1, limit=16
        $region85: #{tpu_custom_call.1} parent=63 // loop_pre_header
          _
        $region86: #{tpu_custom_call.1} parent=63 // loop_header
          %s1979 = sphi 0, %s1983
          %p1980 = scmp.ge.s32.totalorder %s1979, 16
        $region87: #{tpu_custom_call.1} parent=63 // loop_header_branch
          %1982 = sbr.rel (%p1980) target = $region91
        $region88: #{tpu_custom_call.1} parent=63 // loop_body
          %v1984 = vld [vmem:[#allocation5] sm:$0x1]
          %s1985 = scalar_lea.vmem [#allocation2], %s1979
          %v1986 = vld [vmem:[%s1985] sm:$0x1]
          %v1988 = vsel %vm1765, %v1984, 0
          %1990 = vmatprep.subr.mxu0 0.0
          %1991 = vmatpush1.msra.mxu0 %v1950
          %1992 = vmatprep.subr.mxu0 0.0
          %1993 = vmatpush1.msra.mxu0 %v1951
          %1994 = vmatprep.subr.mxu0 0.0
          %1995 = vmatpush1.msra.mxu0 %v1952
          %1996 = vmatprep.subr.mxu0 0.0
          %1997 = vmatpush1.msra.mxu0 %v1953
          %1998 = vmatprep.subr.mxu0 0.0
          %1999 = vmatpush1.msra.mxu0 %v1954
          %2000 = vmatprep.subr.mxu0 0.0
          %2001 = vmatpush1.msra.mxu0 %v1955
          %2002 = vmatprep.subr.mxu0 0.0
          %2003 = vmatpush1.msra.mxu0 %v1956
          %2004 = vmatprep.subr.mxu0 0.0
          %2005 = vmatpush1.msra.mxu0 %v1957
          %2006 = vmatprep.subr.mxu0 0.0
          %2007 = vmatpush1.msra.mxu0 0.0
          %2008 = vmatprep.subr.mxu0 0.0
          %2009 = vmatpush1.msra.mxu0 0.0
          %2010 = vmatprep.subr.mxu0 0.0
          %2011 = vmatpush1.msra.mxu0 0.0
          %2012 = vmatprep.subr.mxu0 0.0
          %2013 = vmatpush1.msra.mxu0 0.0
          %2014 = vmatprep.subr.mxu0 0.0
          %2015 = vmatpush1.msra.mxu0 0.0
          %2016 = vmatprep.subr.mxu0 0.0
          %2017 = vmatpush1.msra.mxu0 0.0
          %2018 = vmatprep.subr.mxu0 0.0
          %2019 = vmatpush1.msra.mxu0 0.0
          %2020 = vmatprep.subr.mxu0 0.0
          %2021 = vmatpush1.msra.mxu0 0.0
          %2022 = vmatprep.subr.mxu0 0.0
          %2023 = vmatpush1.msra.mxu0 0.0
          %2024 = vmatprep.subr.mxu0 0.0
          %2025 = vmatpush1.msra.mxu0 0.0
          %2026 = vmatprep.subr.mxu0 0.0
          %2027 = vmatpush1.msra.mxu0 0.0
          %2028 = vmatprep.subr.mxu0 0.0
          %2029 = vmatpush1.msra.mxu0 0.0
          %2030 = vmatprep.subr.mxu0 0.0
          %2031 = vmatpush1.msra.mxu0 0.0
          %2032 = vmatprep.subr.mxu0 0.0
          %2033 = vmatpush1.msra.mxu0 0.0
          %2034 = vmatprep.subr.mxu0 0.0
          %2035 = vmatpush1.msra.mxu0 0.0
          %2036 = vmatprep.subr.mxu0 0.0
          %2037 = vmatpush1.msra.mxu0 0.0
          %2038 = vmatprep.subr.mxu0 0.0
          %2039 = vmatpush1.msra.mxu0 0.0
          %2040 = vmatprep.subr.mxu0 0.0
          %2041 = vmatpush1.msra.mxu0 0.0
          %2042 = vmatprep.subr.mxu0 0.0
          %2043 = vmatpush1.msra.mxu0 0.0
          %2044 = vmatprep.subr.mxu0 0.0
          %2045 = vmatpush1.msra.mxu0 0.0
          %2046 = vmatprep.subr.mxu0 0.0
          %2047 = vmatpush1.msra.mxu0 0.0
          %2048 = vmatprep.subr.mxu0 0.0
          %2049 = vmatpush1.msra.mxu0 0.0
          %2050 = vmatprep.subr.mxu0 0.0
          %2051 = vmatpush1.msra.mxu0 0.0
          %2052 = vmatprep.subr.mxu0 0.0
          %2053 = vmatpush1.msra.mxu0 0.0
          %2054 = vmatprep.mubr.f32.mxu0 0.0
          %2055 = vmatmul.mubr.f32.gmra.mrb[0].mxu0 %v1988
          %v2056 = vpop.f32.mrb[0].mxu0
          %v2057 = vadd.f32 0.0, %v2056
          %v2058 = vpop.f32.mrb[0].mxu0
          %2059 = vdwg.mxu0
          %v2060 = vadd.f32 %v1986, %v2057
          %v2061 = vxor.u32 %v2060, 2147483648
          %v2062 = vmul.f32 %v2061, 1.442695
          %v2063 = vpow.pop %v2062
          %v2064 = vadd.f32 %v2063, 1.0
          %v2065 = vrcp.pop %v2064
          %v2066 = vmul.f32 1.0, %v2065
          %s2067 = scalar_lea.vmem [#allocation3], %s1979
          %v2068 = vld [vmem:[%s2067] sm:$0x1]
          %2069 = vmatprep.subr.mxu0 0.0
          %2070 = vmatpush1.msra.mxu0 %v1959
          %2071 = vmatprep.subr.mxu0 0.0
          %2072 = vmatpush1.msra.mxu0 %v1960
          %2073 = vmatprep.subr.mxu0 0.0
          %2074 = vmatpush1.msra.mxu0 %v1961
          %2075 = vmatprep.subr.mxu0 0.0
          %2076 = vmatpush1.msra.mxu0 %v1962
          %2077 = vmatprep.subr.mxu0 0.0
          %2078 = vmatpush1.msra.mxu0 %v1963
          %2079 = vmatprep.subr.mxu0 0.0
          %2080 = vmatpush1.msra.mxu0 %v1964
          %2081 = vmatprep.subr.mxu0 0.0
          %2082 = vmatpush1.msra.mxu0 %v1965
          %2083 = vmatprep.subr.mxu0 0.0
          %2084 = vmatpush1.msra.mxu0 %v1966
          %2085 = vmatprep.subr.mxu0 0.0
          %2086 = vmatpush1.msra.mxu0 0.0
          %2087 = vmatprep.subr.mxu0 0.0
          %2088 = vmatpush1.msra.mxu0 0.0
          %2089 = vmatprep.subr.mxu0 0.0
          %2090 = vmatpush1.msra.mxu0 0.0
          %2091 = vmatprep.subr.mxu0 0.0
          %2092 = vmatpush1.msra.mxu0 0.0
          %2093 = vmatprep.subr.mxu0 0.0
          %2094 = vmatpush1.msra.mxu0 0.0
          %2095 = vmatprep.subr.mxu0 0.0
          %2096 = vmatpush1.msra.mxu0 0.0
          %2097 = vmatprep.subr.mxu0 0.0
          %2098 = vmatpush1.msra.mxu0 0.0
          %2099 = vmatprep.subr.mxu0 0.0
          %2100 = vmatpush1.msra.mxu0 0.0
          %2101 = vmatprep.subr.mxu0 0.0
          %2102 = vmatpush1.msra.mxu0 0.0
          %2103 = vmatprep.subr.mxu0 0.0
          %2104 = vmatpush1.msra.mxu0 0.0
          %2105 = vmatprep.subr.mxu0 0.0
          %2106 = vmatpush1.msra.mxu0 0.0
          %2107 = vmatprep.subr.mxu0 0.0
          %2108 = vmatpush1.msra.mxu0 0.0
          %2109 = vmatprep.subr.mxu0 0.0
          %2110 = vmatpush1.msra.mxu0 0.0
          %2111 = vmatprep.subr.mxu0 0.0
          %2112 = vmatpush1.msra.mxu0 0.0
          %2113 = vmatprep.subr.mxu0 0.0
          %2114 = vmatpush1.msra.mxu0 0.0
          %2115 = vmatprep.subr.mxu0 0.0
          %2116 = vmatpush1.msra.mxu0 0.0
          %2117 = vmatprep.subr.mxu0 0.0
          %2118 = vmatpush1.msra.mxu0 0.0
          %2119 = vmatprep.subr.mxu0 0.0
          %2120 = vmatpush1.msra.mxu0 0.0
          %2121 = vmatprep.subr.mxu0 0.0
          %2122 = vmatpush1.msra.mxu0 0.0
          %2123 = vmatprep.subr.mxu0 0.0
          %2124 = vmatpush1.msra.mxu0 0.0
          %2125 = vmatprep.subr.mxu0 0.0
          %2126 = vmatpush1.msra.mxu0 0.0
          %2127 = vmatprep.subr.mxu0 0.0
          %2128 = vmatpush1.msra.mxu0 0.0
          %2129 = vmatprep.subr.mxu0 0.0
          %2130 = vmatpush1.msra.mxu0 0.0
          %2131 = vmatprep.subr.mxu0 0.0
          %2132 = vmatpush1.msra.mxu0 0.0
          %2133 = vmatprep.mubr.f32.mxu0 0.0
          %2134 = vmatmul.mubr.f32.gmra.mrb[0].mxu0 %v1988
          %v2135 = vpop.f32.mrb[0].mxu0
          %v2136 = vadd.f32 0.0, %v2135
          %v2137 = vpop.f32.mrb[0].mxu0
          %2138 = vdwg.mxu0
          %v2139 = vadd.f32 %v2068, %v2136
          %v2140 = vxor.u32 %v2139, 2147483648
          %v2141 = vmul.f32 %v2140, 1.442695
          %v2142 = vpow.pop %v2141
          %v2143 = vadd.f32 %v2142, 1.0
          %v2144 = vrcp.pop %v2143
          %v2145 = vmul.f32 1.0, %v2144
          %s2146 = scalar_lea.vmem [#allocation4], %s1979
          %v2147 = vld [vmem:[%s2146] sm:$0x1]
          %2148 = vmatprep.subr.mxu0 0.0
          %2149 = vmatpush1.msra.mxu0 %v1968
          %2150 = vmatprep.subr.mxu0 0.0
          %2151 = vmatpush1.msra.mxu0 %v1969
          %2152 = vmatprep.subr.mxu0 0.0
          %2153 = vmatpush1.msra.mxu0 %v1970
          %2154 = vmatprep.subr.mxu0 0.0
          %2155 = vmatpush1.msra.mxu0 %v1971
          %2156 = vmatprep.subr.mxu0 0.0
          %2157 = vmatpush1.msra.mxu0 %v1972
          %2158 = vmatprep.subr.mxu0 0.0
          %2159 = vmatpush1.msra.mxu0 %v1973
          %2160 = vmatprep.subr.mxu0 0.0
          %2161 = vmatpush1.msra.mxu0 %v1974
          %2162 = vmatprep.subr.mxu0 0.0
          %2163 = vmatpush1.msra.mxu0 %v1975
          %2164 = vmatprep.subr.mxu0 0.0
          %2165 = vmatpush1.msra.mxu0 0.0
          %2166 = vmatprep.subr.mxu0 0.0
          %2167 = vmatpush1.msra.mxu0 0.0
          %2168 = vmatprep.subr.mxu0 0.0
          %2169 = vmatpush1.msra.mxu0 0.0
          %2170 = vmatprep.subr.mxu0 0.0
          %2171 = vmatpush1.msra.mxu0 0.0
          %2172 = vmatprep.subr.mxu0 0.0
          %2173 = vmatpush1.msra.mxu0 0.0
          %2174 = vmatprep.subr.mxu0 0.0
          %2175 = vmatpush1.msra.mxu0 0.0
          %2176 = vmatprep.subr.mxu0 0.0
          %2177 = vmatpush1.msra.mxu0 0.0
          %2178 = vmatprep.subr.mxu0 0.0
          %2179 = vmatpush1.msra.mxu0 0.0
          %2180 = vmatprep.subr.mxu0 0.0
          %2181 = vmatpush1.msra.mxu0 0.0
          %2182 = vmatprep.subr.mxu0 0.0
          %2183 = vmatpush1.msra.mxu0 0.0
          %2184 = vmatprep.subr.mxu0 0.0
          %2185 = vmatpush1.msra.mxu0 0.0
          %2186 = vmatprep.subr.mxu0 0.0
          %2187 = vmatpush1.msra.mxu0 0.0
          %2188 = vmatprep.subr.mxu0 0.0
          %2189 = vmatpush1.msra.mxu0 0.0
          %2190 = vmatprep.subr.mxu0 0.0
          %2191 = vmatpush1.msra.mxu0 0.0
          %2192 = vmatprep.subr.mxu0 0.0
          %2193 = vmatpush1.msra.mxu0 0.0
          %2194 = vmatprep.subr.mxu0 0.0
          %2195 = vmatpush1.msra.mxu0 0.0
          %2196 = vmatprep.subr.mxu0 0.0
          %2197 = vmatpush1.msra.mxu0 0.0
          %2198 = vmatprep.subr.mxu0 0.0
          %2199 = vmatpush1.msra.mxu0 0.0
          %2200 = vmatprep.subr.mxu0 0.0
          %2201 = vmatpush1.msra.mxu0 0.0
          %2202 = vmatprep.subr.mxu0 0.0
          %2203 = vmatpush1.msra.mxu0 0.0
          %2204 = vmatprep.subr.mxu0 0.0
          %2205 = vmatpush1.msra.mxu0 0.0
          %2206 = vmatprep.subr.mxu0 0.0
          %2207 = vmatpush1.msra.mxu0 0.0
          %2208 = vmatprep.subr.mxu0 0.0
          %2209 = vmatpush1.msra.mxu0 0.0
          %2210 = vmatprep.subr.mxu0 0.0
          %2211 = vmatpush1.msra.mxu0 0.0
          %2212 = vmatprep.mubr.f32.mxu0 0.0
          %2213 = vmatmul.mubr.f32.gmra.mrb[0].mxu0 %v1988
          %v2214 = vpop.f32.mrb[0].mxu0
          %v2215 = vadd.f32 %v1977, %v2214
          %v2216 = vpop.f32.mrb[0].mxu0
          %2217 = vdwg.mxu0
          %v2218 = vmul.f32 %v2066, %v2215
          %v2219 = vadd.f32 %v2147, %v2218
          %v2220 = vtanh.pop %v2219
          %v2221 = vsub.f32 1.0, %v2145
          %v2222 = vmul.f32 %v2221, %v2220
          %v2223 = vmul.f32 %v2145, %v1984
          %v2224 = vadd.f32 %v2222, %v2223
          %2225 = vst.msk [vmem:[#allocation5] sm:$0x1] %vm1948, %v2224
          %s2226 = scalar_lea.vmem [#allocation6], %s1979
          %2227 = vst.msk [vmem:[%s2226] sm:$0x1] %vm1948, %v2224
        $region89: #{tpu_custom_call.1} parent=63 // loop_footer
          %s1983 = sadd.s32 1, %s1979
        $region90: #{tpu_custom_call.1} parent=63 // loop_footer_branch
          %1978 = sbr.rel target = $region86
        $region91: #{tpu_custom_call.1} parent=63 // loop_exit
          _
        %v2228 = vld [vmem:[#allocation6] sm:$0xff]
        %v2229 = vld [vmem:[#allocation6 + $0x8] sm:$0xff]
        %v2230 = vmax.f32 %v2228, 0.0
        %v2231 = vmax.f32 %v2229, 0.0
        %v2232 = vld [vmem:[%s8] sm:$0xff]
        %v2233 = vld [vmem:[%s8 + $0x8] sm:$0xff]
        %v2234 = vld [vmem:[%s8 + $0x10] sm:$0xff]
        %v2235 = vld [vmem:[%s8 + $0x18] sm:$0xff]
        %v2236 = vld [vmem:[%s8 + $0x20] sm:$0xff]
        %v2237 = vld [vmem:[%s8 + $0x28] sm:$0xff]
        %v2238 = vld [vmem:[%s8 + $0x30] sm:$0xff]
        %v2239 = vld [vmem:[%s8 + $0x38] sm:$0xff]
        %v2240 = vld [vmem:[%s9] sm:$0x1]
        %v2242 = vlaneseq
        %v2243 = vshrl.u32 %v2242, 7
        %v2244 = vsub.s32 0, %v2243
        %v2245 = vrot.slane %v2240, %v2244
        %v2248 = vsel %vm1765, %v2230, 0
        %v2251 = vsel %vm1765, %v2231, 0
        %2253 = vmatprep.subr.mxu0 0.0
        %2254 = vmatpush1.msra.mxu0 %v2232
        %2255 = vmatprep.subr.mxu0 0.0
        %2256 = vmatpush1.msra.mxu0 %v2233
        %2257 = vmatprep.subr.mxu0 0.0
        %2258 = vmatpush1.msra.mxu0 %v2234
        %2259 = vmatprep.subr.mxu0 0.0
        %2260 = vmatpush1.msra.mxu0 %v2235
        %2261 = vmatprep.subr.mxu0 0.0
        %2262 = vmatpush1.msra.mxu0 %v2236
        %2263 = vmatprep.subr.mxu0 0.0
        %2264 = vmatpush1.msra.mxu0 %v2237
        %2265 = vmatprep.subr.mxu0 0.0
        %2266 = vmatpush1.msra.mxu0 %v2238
        %2267 = vmatprep.subr.mxu0 0.0
        %2268 = vmatpush1.msra.mxu0 %v2239
        %2269 = vmatprep.subr.mxu0 0.0
        %2270 = vmatpush1.msra.mxu0 0.0
        %2271 = vmatprep.subr.mxu0 0.0
        %2272 = vmatpush1.msra.mxu0 0.0
        %2273 = vmatprep.subr.mxu0 0.0
        %2274 = vmatpush1.msra.mxu0 0.0
        %2275 = vmatprep.subr.mxu0 0.0
        %2276 = vmatpush1.msra.mxu0 0.0
        %2277 = vmatprep.subr.mxu0 0.0
        %2278 = vmatpush1.msra.mxu0 0.0
        %2279 = vmatprep.subr.mxu0 0.0
        %2280 = vmatpush1.msra.mxu0 0.0
        %2281 = vmatprep.subr.mxu0 0.0
        %2282 = vmatpush1.msra.mxu0 0.0
        %2283 = vmatprep.subr.mxu0 0.0
        %2284 = vmatpush1.msra.mxu0 0.0
        %2285 = vmatprep.subr.mxu0 0.0
        %2286 = vmatpush1.msra.mxu0 0.0
        %2287 = vmatprep.subr.mxu0 0.0
        %2288 = vmatpush1.msra.mxu0 0.0
        %2289 = vmatprep.subr.mxu0 0.0
        %2290 = vmatpush1.msra.mxu0 0.0
        %2291 = vmatprep.subr.mxu0 0.0
        %2292 = vmatpush1.msra.mxu0 0.0
        %2293 = vmatprep.subr.mxu0 0.0
        %2294 = vmatpush1.msra.mxu0 0.0
        %2295 = vmatprep.subr.mxu0 0.0
        %2296 = vmatpush1.msra.mxu0 0.0
        %2297 = vmatprep.subr.mxu0 0.0
        %2298 = vmatpush1.msra.mxu0 0.0
        %2299 = vmatprep.subr.mxu0 0.0
        %2300 = vmatpush1.msra.mxu0 0.0
        %2301 = vmatprep.subr.mxu0 0.0
        %2302 = vmatpush1.msra.mxu0 0.0
        %2303 = vmatprep.subr.mxu0 0.0
        %2304 = vmatpush1.msra.mxu0 0.0
        %2305 = vmatprep.subr.mxu0 0.0
        %2306 = vmatpush1.msra.mxu0 0.0
        %2307 = vmatprep.subr.mxu0 0.0
        %2308 = vmatpush1.msra.mxu0 0.0
        %2309 = vmatprep.subr.mxu0 0.0
        %2310 = vmatpush1.msra.mxu0 0.0
        %2311 = vmatprep.subr.mxu0 0.0
        %2312 = vmatpush1.msra.mxu0 0.0
        %2313 = vmatprep.subr.mxu0 0.0
        %2314 = vmatpush1.msra.mxu0 0.0
        %2315 = vmatprep.subr.mxu0 0.0
        %2316 = vmatpush1.msra.mxu0 0.0
        %2317 = vmatprep.mubr.f32.mxu0 0.0
        %2318 = vmatmul.mubr.f32.gmra.mrb[0].mxu0 %v2248
        %v2319 = vpop.f32.mrb[0].mxu0
        %v2320 = vadd.f32 %v2245, %v2319
        %v2321 = vpop.f32.mrb[0].mxu0
        %2322 = vmatprep.mubr.f32.mxu0 0.0
        %2323 = vmatmul.mubr.f32.gmra.mrb[0].mxu0 %v2251
        %v2324 = vpop.f32.mrb[0].mxu0
        %v2325 = vadd.f32 %v2245, %v2324
        %v2326 = vpop.f32.mrb[0].mxu0
        %2327 = vdwg.mxu0
        %v2328 = vadd.f32 %v1671, %v2320
        %v2329 = vadd.f32 %v1672, %v2325
        %v2330 = vld [vmem:[%s10] sm:$0x1]
        %s2331 = scalar_lea.vmem %s10, 1
        %v2332 = vld [vmem:[%s2331] sm:$0x1]
        %v2333 = vsel %vm471, %v2328, 0.0
        %2334 = vadd.xlane.f32.xlu0 %v2333
        %v2335 = vpop.xlane.xlu0 %2334
        %v2336 = vsel %vm471, %v2329, 0.0
        %2337 = vadd.xlane.f32.xlu0 %v2336
        %v2338 = vpop.xlane.xlu0 %2337
        %v2339 = vmul.f32 %v2335, %v1636
        %v2340 = vmul.f32 %v2338, %v1636
        %v2341 = vsub.f32 %v2328, %v2339
        %v2342 = vsub.f32 %v2329, %v2340
        %v2343 = vmul.f32 %v2341, %v2341
        %v2344 = vmul.f32 %v2342, %v2342
        %v2345 = vsel %vm471, %v2343, 0.0
        %2346 = vadd.xlane.f32.xlu0 %v2345
        %v2347 = vpop.xlane.xlu0 %2346
        %v2348 = vsel %vm471, %v2344, 0.0
        %2349 = vadd.xlane.f32.xlu0 %v2348
        %v2350 = vpop.xlane.xlu0 %2349
        %v2351 = vmul.f32 %v2347, %v1636
        %v2352 = vmul.f32 %v2350, %v1636
        %v2353 = vadd.f32 %v2351, 1e-06
        %v2354 = vadd.f32 %v2352, 1e-06
        %v2355 = vrsqrt.pop %v2353
        %v2356 = vrsqrt.pop %v2354
        %v2357 = vmul.f32 %v2341, %v2355
        %v2358 = vmul.f32 %v2342, %v2356
        %v2360 = vlaneseq
        %v2361 = vshrl.u32 %v2360, 7
        %v2362 = vsub.s32 0, %v2361
        %v2363 = vrot.slane %v2330, %v2362
        %v2365 = vmul.f32 %v2357, %v2363
        %v2366 = vmul.f32 %v2358, %v2363
        %v2368 = vlaneseq
        %v2369 = vshrl.u32 %v2368, 7
        %v2370 = vsub.s32 0, %v2369
        %v2371 = vrot.slane %v2332, %v2370
        %v2373 = vadd.f32 %v2365, %v2371
        %v2374 = vadd.f32 %v2366, %v2371
        %2375 = vst.msk [vmem:[%s462] sm:$0xff] %vm471, %v2373
        %2376 = vst.msk [vmem:[%s462 + $0x8] sm:$0xff] %vm471, %v2374
        %s2377 = sand.u32 %s274, 1
        %s2378 = scalar_lea.sflag [#allocation9], %s2377
        %s2379 = sand.u32 %s274, 1
        %s2380 = smul.addr %s2379, 16
        %s2381 = scalar_lea.vmem [#allocation16], %s2380
        // Predicated region
        $region92: #{tpu_custom_call.1} parent=63 // pred_check
          %p2382 = pneg %p284
        $region93: #{tpu_custom_call.1} parent=63 // pred_check_branch
          %2384 = sbr.rel (%p2382) target = $region95
        $region94: #{tpu_custom_call.1} parent=63 // pred_region
          %s2386 = ssub.s32 256, 256
          %2387 = vsyncadd %s2378, %s2386
          %s2388 = smul.addr %s30, 2
          %s2389 = smul.addr %s2388, 128
          %s2390 = scalar_lea.hbm %s11, %s2389
          %s2391 = sshll.u32 %s2381, 4
          %s2392 = int_to_ptr.vmem [resolvable:$true] %s2391
          %2397 = dma.vmem_to_hbm [thread:$0]  %s2392, 256, %s2390, %s2378, 128, 128, 8
        $region95: #{tpu_custom_call.1} parent=63 // pred_fallthru
          _
      $region64: #{tpu_custom_call.1} parent=5 // pred_fallthru
        _
      %p2398 = scmp.le.s32.totalorder 2, %s25
      // Predicated region
      $region96: #{tpu_custom_call.1} parent=5 // pred_check
        %p2399 = pneg %p2398
      $region97: #{tpu_custom_call.1} parent=5 // pred_check_branch
        %2401 = sbr.rel (%p2399) target = $region99
      $region98: #{tpu_custom_call.1} parent=5 // pred_region
        %s2402 = ssub.s32 %s25, 2
        // Predicated region
        $region100: #{tpu_custom_call.1} parent=98 // pred_check
          %p2403 = pneg %p290
        $region101: #{tpu_custom_call.1} parent=98 // pred_check_branch
          %2405 = sbr.rel (%p2403) target = $region103
        $region102: #{tpu_custom_call.1} parent=98 // pred_region
          %s2406 = sand.u32 %s275, 1
          %s2407 = scalar_lea.sflag [#allocation9], %s2406
          %s2408 = sand.u32 %s275, 1
          %s2409 = smul.addr %s2408, 16
          %s2410 = scalar_lea.vmem [#allocation16], %s2409
          %2411 = dma.done %s2407, 256
        $region103: #{tpu_custom_call.1} parent=98 // pred_fallthru
          _
      $region99: #{tpu_custom_call.1} parent=5 // pred_fallthru
        _
    $region6: #{tpu_custom_call.1} parent=1 // loop_footer
      %s29 = sadd.s32 1, %s25
    $region7: #{tpu_custom_call.1} parent=1 // loop_footer_branch
      %24 = sbr.rel target = $region3
    $region8: #{tpu_custom_call.1} parent=1 // loop_exit
      _
    %2412 = vsyncpa [#allocation8], 1
    %s2413 = scalar_lea.sflag [#allocation8], 1
    %2414 = vsyncpa %s2413, 1
    %2415 = vsyncpa [#allocation11], 1
    %2416 = vsyncpa [#allocation14], 1
    %2417 = vsyncpa [#allocation9], 1
    %s2418 = scalar_lea.sflag [#allocation9], 1
    %2419 = vsyncpa %s2418, 1

</llo_original>
